<compile_context>
chip_gen: v7x
topology: tpu7x:2x2x1
jax: 0.10.0
libtpu: 0.0.40
codegen_flags: <defaults>
</compile_context>

<pallas_src>
import functools
import math

import jax
import jax.numpy as jnp
from jax.experimental import pallas as pl
from jax.experimental.pallas import tpu as pltpu


# ----------------------------------------------------------------------------- #
# Kernel
# ----------------------------------------------------------------------------- #
def _layernorm(x, gamma, beta, eps):
    mu = jnp.mean(x, axis=-1, keepdims=True)
    var = jnp.mean((x - mu) ** 2, axis=-1, keepdims=True)  # biased var, like PyTorch
    return (x - mu) * jax.lax.rsqrt(var + eps) * gamma + beta


def encoder_layer_kernel(
    x_ref,      # (BB*S, D) f32  src slab           (value input + outer residual)
    qk_ref,     # (BB*S, D) f32  (src + pos) slab   (q/k input + attention residual)
    gp_ref,     # (H, S, S) bf16 graph_pos permuted like .permute(2,1,0)
    wqk_ref,    # (D, 2D) bf16   [wq * 1/temp | wk], x @ W layout
    wv_ref, wo_ref,                                 # (D, D) bf16, x @ W layout
    g_ln_ref, b_ln_ref,                             # (1, D) f32 attn layer_norm (eps 1e-6)
    g1_ref, b1_ref,                                 # (1, D) f32 norm1           (eps 1e-5)
    g2_ref, b2_ref,                                 # (1, D) f32 norm2           (eps 1e-5)
    w1_ref, bb1_ref,                                # (D, FF) bf16, (1, FF) f32
    w2_ref, bb2_ref,                                # (FF, D) bf16, (1, D) f32
    out_ref,    # (BB*S, D) f32
    attn_ref,   # (BB, H, S, S) f32  softmax attention probabilities (attno)
    *, n_head, d_k, d_model, block_b, seq_len,
):
    x = x_ref[...]          # (BB*S, D) f32
    qk = qk_ref[...]        # (BB*S, D) f32
    x_bf = x.astype(jnp.bfloat16)
    qk_bf = qk.astype(jnp.bfloat16)

    # --- projections over the whole batch slab (MXU, bf16 in / f32 acc) ---
    # QK = [Q*1/temp | K]  in one matmul; V separate (different input).
    QK = jnp.dot(qk_bf, wqk_ref[...], preferred_element_type=jnp.float32)   # (BB*S, 2D)
    V = jnp.dot(x_bf, wv_ref[...], preferred_element_type=jnp.float32)      # (BB*S, D)

    gp = gp_ref[...].astype(jnp.float32)     # (H, S, S)

    # --- scaled dot-product attention with graph positional weighting ---
    # Per-(batch, head) matmuls; heads are static lane slices (no transposes).
    # TODO(synk): attention / fc / ffn dropout are identity at inference.
    ctx_rows = []
    for b in range(block_b):
        r0 = b * seq_len
        QKb = QK[r0:r0 + seq_len]    # (S, 2D)
        Vb = V[r0:r0 + seq_len]      # (S, D)
        head_parts = []
        for h in range(n_head):
            c0 = h * d_k
            Qh = QKb[:, c0:c0 + d_k].astype(jnp.bfloat16)                # (S, dk), pre-scaled
            Kh = QKb[:, d_model + c0:d_model + c0 + d_k].astype(jnp.bfloat16)
            Vh = Vb[:, c0:c0 + d_k].astype(jnp.bfloat16)
            scores = jax.lax.dot_general(                                # Qh @ Kh.T
                Qh, Kh,
                dimension_numbers=(((1,), (1,)), ((), ())),
                preferred_element_type=jnp.float32)                      # (S, S) f32
            m = jnp.max(scores, axis=-1, keepdims=True)
            e = jnp.exp(scores - m)
            denom = jnp.sum(e, axis=-1, keepdims=True)
            probs = e * pl.reciprocal(denom, approx=True)                # softmax
            attn_ref[b, h] = probs                                       # attno output
            weighted = (probs * gp[h]).astype(jnp.bfloat16)              # graph gating
            ctx_h = jnp.dot(weighted, Vh,
                            preferred_element_type=jnp.float32)          # (S, dk) f32
            head_parts.append(ctx_h)
        ctx_rows.append(jnp.concatenate(head_parts, axis=-1))            # (S, D)
    ctx = jnp.concatenate(ctx_rows, axis=0)                              # (BB*S, D)

    # --- output projection + attention residual + attn layer_norm (eps 1e-6) ---
    attn_out = jnp.dot(ctx.astype(jnp.bfloat16), wo_ref[...],
                       preferred_element_type=jnp.float32)
    a = attn_out + qk                                                    # residual = q(+pos)
    a = _layernorm(a, g_ln_ref[...], b_ln_ref[...], 1e-6)

    # --- encoder layer: residual + norm1 ---
    s = x + a
    s = _layernorm(s, g1_ref[...], b1_ref[...], 1e-5)

    # --- feed-forward (relu) + residual + norm2 ---
    hid = jnp.dot(s.astype(jnp.bfloat16), w1_ref[...],
                  preferred_element_type=jnp.float32) + bb1_ref[...]
    hid = jnp.maximum(hid, 0.0)
    ff = jnp.dot(hid.astype(jnp.bfloat16), w2_ref[...],
                 preferred_element_type=jnp.float32) + bb2_ref[...]
    s = s + ff
    s = _layernorm(s, g2_ref[...], b2_ref[...], 1e-5)

    out_ref[...] = s


# ----------------------------------------------------------------------------- #
# Wrapper
# ----------------------------------------------------------------------------- #
def transformer_encoder_layer(src_sbd, pos_sbd, graph_pos, params, block_b=None):
    """src_sbd/pos_sbd: (S, B, D); graph_pos: (S, S, H). Returns ((S,B,D), (B,H,S,S))."""
    S, B, D = src_sbd.shape
    H = params["n_head"]
    d_k = D // H
    FF = params["w1"].shape[1]
    inv_temp = 1.0 / math.sqrt(d_k)

    # Fold batches into the matmul M dimension: pick the largest divisor of B
    # that keeps block_b * S near ~128 rows per grid step.
    if block_b is None:
        target = max(1, 128 // S)
        block_b = 1
        for cand in range(1, B + 1):
            if B % cand == 0 and cand <= target:
                block_b = cand
    grid_b = B // block_b
    rows = block_b * S

    x = jnp.transpose(src_sbd, (1, 0, 2)).reshape(B * S, D)             # (B*S, D)
    qk = jnp.transpose(src_sbd + pos_sbd, (1, 0, 2)).reshape(B * S, D)  # (B*S, D)
    gp = jnp.transpose(graph_pos, (2, 1, 0)).astype(jnp.bfloat16)       # (H, S, S)

    bf = lambda a: a.astype(jnp.bfloat16)
    # Fuse Q/K projections and fold the 1/temperature scale into wq.
    wqk = bf(jnp.concatenate([params["wq"] * inv_temp, params["wk"]], axis=1))  # (D, 2D)

    slab_spec = pl.BlockSpec((rows, D), lambda i: (i, 0))
    inv2d = lambda shape: pl.BlockSpec(shape, lambda i: (0, 0))         # batch-invariant

    in_specs = [
        slab_spec,                                        # x
        slab_spec,                                        # qk
        pl.BlockSpec((H, S, S), lambda i: (0, 0, 0)),     # graph_pos
        inv2d((D, 2 * D)),                                # wqk
        inv2d((D, D)), inv2d((D, D)),                     # wv, wo
        inv2d((1, D)), inv2d((1, D)),                     # attn layer_norm
        inv2d((1, D)), inv2d((1, D)),                     # norm1
        inv2d((1, D)), inv2d((1, D)),                     # norm2
        inv2d((D, FF)), inv2d((1, FF)),                   # linear1
        inv2d((FF, D)), inv2d((1, D)),                    # linear2
    ]
    out_specs = (
        pl.BlockSpec((rows, D), lambda i: (i, 0)),
        pl.BlockSpec((block_b, H, S, S), lambda i: (i, 0, 0, 0)),
    )
    out_shapes = (
        jax.ShapeDtypeStruct((B * S, D), jnp.float32),
        jax.ShapeDtypeStruct((B, H, S, S), jnp.float32),
    )

    kernel = functools.partial(encoder_layer_kernel, n_head=H, d_k=d_k, d_model=D,
                               block_b=block_b, seq_len=S)
    out2d, attn = pl.pallas_call(
        kernel,
        out_shape=out_shapes,
        grid_spec=pltpu.PrefetchScalarGridSpec(
            num_scalar_prefetch=0,
            grid=(grid_b,),
            in_specs=in_specs,
            out_specs=out_specs,
        ),
        compiler_params=pltpu.CompilerParams(
            dimension_semantics=("parallel",),            # megacore-shardable batch axis
            vmem_limit_bytes=64 * 1024 * 1024,
        ),
    )(
        x, qk, gp,
        wqk, bf(params["wv"]), bf(params["wo"]),
        params["g_ln"], params["b_ln"],
        params["g1"], params["b1"],
        params["g2"], params["b2"],
        bf(params["w1"]), params["bb1"], bf(params["w2"]), params["bb2"],
    )
    out = jnp.transpose(out2d.reshape(B, S, D), (1, 0, 2))              # (S, B, D)
    return out, attn


# ----------------------------------------------------------------------------- #
# Pure-JAX f32 reference (mirrors the PyTorch forward in eval mode)
# ----------------------------------------------------------------------------- #
def reference(src_sbd, pos_sbd, graph_pos, params):
    S, B, D = src_sbd.shape
    H = params["n_head"]
    d_k = D // H

    def ln(x, g, b, eps):
        mu = jnp.mean(x, axis=-1, keepdims=True)
        var = jnp.mean((x - mu) ** 2, axis=-1, keepdims=True)
        return (x - mu) / jnp.sqrt(var + eps) * g + b

    x = jnp.transpose(src_sbd, (1, 0, 2))
    qk = jnp.transpose(src_sbd + pos_sbd, (1, 0, 2))

    Q = qk @ params["wq"]
    K = qk @ params["wk"]
    V = x @ params["wv"]
    Qh = Q.reshape(B, S, H, d_k).transpose(0, 2, 1, 3)
    Kh = K.reshape(B, S, H, d_k).transpose(0, 2, 1, 3)
    Vh = V.reshape(B, S, H, d_k).transpose(0, 2, 1, 3)

    scores = jnp.einsum("bhqd,bhkd->bhqk", Qh / (d_k ** 0.5), Kh)
    attno = jax.nn.softmax(scores, axis=-1)
    gp = jnp.transpose(graph_pos, (2, 1, 0))[None]          # (1, H, S, S)
    ctx = jnp.einsum("bhqk,bhkd->bhqd", attno * gp, Vh)
    ctx = ctx.transpose(0, 2, 1, 3).reshape(B, S, D)

    a = ctx @ params["wo"] + qk
    a = ln(a, params["g_ln"][0], params["b_ln"][0], 1e-6)

    s = x + a
    s = ln(s, params["g1"][0], params["b1"][0], 1e-5)
    ff = jnp.maximum(s @ params["w1"] + params["bb1"][0], 0.0) @ params["w2"] + params["bb2"][0]
    s = s + ff
    s = ln(s, params["g2"][0], params["b2"][0], 1e-5)
    return jnp.transpose(s, (1, 0, 2)), attno


# ----------------------------------------------------------------------------- #
# Main
# ----------------------------------------------------------------------------- #
if __name__ == "__main__":
    S, B, D, H, FF = 8, 2, 32, 4, 64

    key = jax.random.PRNGKey(0)
    keys = jax.random.split(key, 12)

    src = jax.random.normal(keys[0], (S, B, D), dtype=jnp.float32)
    pos = 0.1 * jax.random.normal(keys[1], (S, B, D), dtype=jnp.float32)
    graph_pos = jax.nn.sigmoid(jax.random.normal(keys[2], (S, S, H), dtype=jnp.float32))

    def w(k, shape, scale=0.05):
        return scale * jax.random.normal(k, shape, dtype=jnp.float32)

    params = {
        "n_head": H,
        "wq": w(keys[3], (D, D)),
        "wk": w(keys[4], (D, D)),
        "wv": w(keys[5], (D, D)),
        "wo": w(keys[6], (D, D)),
        "g_ln": jnp.ones((1, D), jnp.float32),
        "b_ln": jnp.zeros((1, D), jnp.float32),
        "g1": jnp.ones((1, D), jnp.float32),
        "b1": jnp.zeros((1, D), jnp.float32),
        "g2": jnp.ones((1, D), jnp.float32),
        "b2": jnp.zeros((1, D), jnp.float32),
        "w1": w(keys[7], (D, FF)),
        "bb1": w(keys[8], (1, FF)),
        "w2": w(keys[9], (FF, D)),
        "bb2": w(keys[10], (1, D)),
    }

    out, attn = transformer_encoder_layer(src, pos, graph_pos, params)
    out = jax.block_until_ready(out)
    attn = jax.block_until_ready(attn)

    ref_out, ref_attn = reference(src, pos, graph_pos, params)
    assert out.shape == (S, B, D) and attn.shape == (B, H, S, S)
    # Tolerances account for bf16 MXU inputs (f32 reference).
    assert jnp.allclose(out, ref_out, rtol=1e-2, atol=1e-2), "output mismatch"
    assert jnp.allclose(attn, ref_attn, rtol=5e-3, atol=5e-3), "attn mismatch"

    print("KERNEL_OK")
</pallas_src>

<mosaic_0001>
module attributes {stable_mosaic.version = 11 : i64} {
  func.func @encoder_layer_kernel(%arg0: i32, %arg1: memref<16x32xf32, #tpu.memory_space<vmem>>, %arg2: memref<16x32xf32, #tpu.memory_space<vmem>>, %arg3: memref<4x8x8xbf16, #tpu.memory_space<vmem>>, %arg4: memref<32x64xbf16, #tpu.memory_space<vmem>>, %arg5: memref<32x32xbf16, #tpu.memory_space<vmem>>, %arg6: memref<32x32xbf16, #tpu.memory_space<vmem>>, %arg7: memref<1x32xf32, #tpu.memory_space<vmem>>, %arg8: memref<1x32xf32, #tpu.memory_space<vmem>>, %arg9: memref<1x32xf32, #tpu.memory_space<vmem>>, %arg10: memref<1x32xf32, #tpu.memory_space<vmem>>, %arg11: memref<1x32xf32, #tpu.memory_space<vmem>>, %arg12: memref<1x32xf32, #tpu.memory_space<vmem>>, %arg13: memref<32x64xbf16, #tpu.memory_space<vmem>>, %arg14: memref<1x64xf32, #tpu.memory_space<vmem>>, %arg15: memref<64x32xbf16, #tpu.memory_space<vmem>>, %arg16: memref<1x32xf32, #tpu.memory_space<vmem>>, %arg17: memref<16x32xf32, #tpu.memory_space<vmem>>, %arg18: memref<2x4x8x8xf32, #tpu.memory_space<vmem>>) attributes {dimension_semantics = [#tpu.dimension_semantics<parallel>], iteration_bounds = array<i64: 1>, scalar_prefetch = 0 : i64, scratch_operands = 0 : i64, tpu.core_type = #tpu.core_type<tc>, window_params = [{transform_indices = @transform_0, window_bounds = array<i64: 16, 32>}, {transform_indices = @transform_1, window_bounds = array<i64: 16, 32>}, {pipeline_mode = #tpu.pipeline_mode<synchronous>, transform_indices = @transform_2, window_bounds = array<i64: 4, 8, 8>}, {pipeline_mode = #tpu.pipeline_mode<synchronous>, transform_indices = @transform_3, window_bounds = array<i64: 32, 64>}, {pipeline_mode = #tpu.pipeline_mode<synchronous>, transform_indices = @transform_4, window_bounds = array<i64: 32, 32>}, {pipeline_mode = #tpu.pipeline_mode<synchronous>, transform_indices = @transform_5, window_bounds = array<i64: 32, 32>}, {pipeline_mode = #tpu.pipeline_mode<synchronous>, transform_indices = @transform_6, window_bounds = array<i64: 1, 32>}, {pipeline_mode = #tpu.pipeline_mode<synchronous>, transform_indices = @transform_7, window_bounds = array<i64: 1, 32>}, {pipeline_mode = #tpu.pipeline_mode<synchronous>, transform_indices = @transform_8, window_bounds = array<i64: 1, 32>}, {pipeline_mode = #tpu.pipeline_mode<synchronous>, transform_indices = @transform_9, window_bounds = array<i64: 1, 32>}, {pipeline_mode = #tpu.pipeline_mode<synchronous>, transform_indices = @transform_10, window_bounds = array<i64: 1, 32>}, {pipeline_mode = #tpu.pipeline_mode<synchronous>, transform_indices = @transform_11, window_bounds = array<i64: 1, 32>}, {pipeline_mode = #tpu.pipeline_mode<synchronous>, transform_indices = @transform_12, window_bounds = array<i64: 32, 64>}, {pipeline_mode = #tpu.pipeline_mode<synchronous>, transform_indices = @transform_13, window_bounds = array<i64: 1, 64>}, {pipeline_mode = #tpu.pipeline_mode<synchronous>, transform_indices = @transform_14, window_bounds = array<i64: 64, 32>}, {pipeline_mode = #tpu.pipeline_mode<synchronous>, transform_indices = @transform_15, window_bounds = array<i64: 1, 32>}, {transform_indices = @transform_16, window_bounds = array<i64: 16, 32>}, {transform_indices = @transform_17, window_bounds = array<i64: 2, 4, 8, 8>}]} {
    %c0 = arith.constant 0 : index
    %c0_0 = arith.constant 0 : index
    %0 = vector.load %arg1[%c0, %c0_0] : memref<16x32xf32, #tpu.memory_space<vmem>>, vector<16x32xf32>
    %c0_1 = arith.constant 0 : index
    %c0_2 = arith.constant 0 : index
    %1 = vector.load %arg2[%c0_1, %c0_2] : memref<16x32xf32, #tpu.memory_space<vmem>>, vector<16x32xf32>
    %2 = arith.truncf %0 : vector<16x32xf32> to vector<16x32xbf16>
    %3 = arith.truncf %1 : vector<16x32xf32> to vector<16x32xbf16>
    %c0_3 = arith.constant 0 : index
    %c0_4 = arith.constant 0 : index
    %4 = vector.load %arg4[%c0_3, %c0_4] : memref<32x64xbf16, #tpu.memory_space<vmem>>, vector<32x64xbf16>
    %cst = arith.constant dense<0.000000e+00> : vector<16x64xf32>
    %5 = tpu.matmul %3, %4, %cst {dimension_numbers = #tpu.dot_dimension_numbers<[1], [0], [0], [1], [0, 0, 1, 1], [], []>} : vector<16x32xbf16>, vector<32x64xbf16>, vector<16x64xf32> -> vector<16x64xf32>
    %c0_5 = arith.constant 0 : index
    %c0_6 = arith.constant 0 : index
    %6 = vector.load %arg5[%c0_5, %c0_6] : memref<32x32xbf16, #tpu.memory_space<vmem>>, vector<32x32xbf16>
    %cst_7 = arith.constant dense<0.000000e+00> : vector<16x32xf32>
    %7 = tpu.matmul %2, %6, %cst_7 {dimension_numbers = #tpu.dot_dimension_numbers<[1], [0], [0], [1], [0, 0, 1, 1], [], []>} : vector<16x32xbf16>, vector<32x32xbf16>, vector<16x32xf32> -> vector<16x32xf32>
    %c0_8 = arith.constant 0 : index
    %c0_9 = arith.constant 0 : index
    %c0_10 = arith.constant 0 : index
    %8 = vector.load %arg3[%c0_8, %c0_9, %c0_10] : memref<4x8x8xbf16, #tpu.memory_space<vmem>>, vector<4x8x8xbf16>
    %9 = arith.extf %8 : vector<4x8x8xbf16> to vector<4x8x8xf32>
    %10 = vector.extract_strided_slice %5 {offsets = [0, 0], sizes = [8, 64], strides = [1, 1]} : vector<16x64xf32> to vector<8x64xf32>
    %11 = vector.extract_strided_slice %7 {offsets = [0, 0], sizes = [8, 32], strides = [1, 1]} : vector<16x32xf32> to vector<8x32xf32>
    %12 = vector.extract_strided_slice %10 {offsets = [0, 0], sizes = [8, 8], strides = [1, 1]} : vector<8x64xf32> to vector<8x8xf32>
    %13 = arith.truncf %12 : vector<8x8xf32> to vector<8x8xbf16>
    %14 = vector.extract_strided_slice %10 {offsets = [0, 32], sizes = [8, 8], strides = [1, 1]} : vector<8x64xf32> to vector<8x8xf32>
    %15 = arith.truncf %14 : vector<8x8xf32> to vector<8x8xbf16>
    %16 = vector.extract_strided_slice %11 {offsets = [0, 0], sizes = [8, 8], strides = [1, 1]} : vector<8x32xf32> to vector<8x8xf32>
    %17 = arith.truncf %16 : vector<8x8xf32> to vector<8x8xbf16>
    %cst_11 = arith.constant dense<0.000000e+00> : vector<8x8xf32>
    %18 = tpu.matmul %13, %15, %cst_11 {dimension_numbers = #tpu.dot_dimension_numbers<[1], [1], [0], [0], [0, 0, 1, 0], [], []>} : vector<8x8xbf16>, vector<8x8xbf16>, vector<8x8xf32> -> vector<8x8xf32>
    %cst_12 = arith.constant dense<0xFF800000> : vector<8xf32>
    %19 = vector.multi_reduction <maximumf>, %18, %cst_12 [1] : vector<8x8xf32> to vector<8xf32>
    %20 = vector.shape_cast %19 : vector<8xf32> to vector<8x1xf32>
    %21 = vector.broadcast %20 : vector<8x1xf32> to vector<8x8xf32>
    %22 = arith.subf %18, %21 : vector<8x8xf32>
    %23 = math.exp %22 : vector<8x8xf32>
    %cst_13 = arith.constant dense<0.000000e+00> : vector<8xf32>
    %24 = vector.multi_reduction <add>, %23, %cst_13 [1] : vector<8x8xf32> to vector<8xf32>
    %25 = vector.shape_cast %24 : vector<8xf32> to vector<8x1xf32>
    %26 = tpu.reciprocal %25 {approx = true} : vector<8x1xf32> -> vector<8x1xf32>
    %27 = vector.broadcast %26 : vector<8x1xf32> to vector<8x8xf32>
    %28 = arith.mulf %23, %27 : vector<8x8xf32>
    %c0_14 = arith.constant 0 : index
    %c0_15 = arith.constant 0 : index
    %c0_16 = arith.constant 0 : index
    %c0_17 = arith.constant 0 : index
    %29 = vector.load %arg18[%c0_14, %c0_15, %c0_16, %c0_17] : memref<2x4x8x8xf32, #tpu.memory_space<vmem>>, vector<1x1x8x8xf32>
    %30 = vector.shape_cast %29 : vector<1x1x8x8xf32> to vector<8x8xf32>
    %31 = vector.shape_cast %28 : vector<8x8xf32> to vector<1x1x8x8xf32>
    tpu.vector_store %arg18[%c0_14, %c0_15, %c0_16, %c0_17], %31 {strides = array<i32>} : memref<2x4x8x8xf32, #tpu.memory_space<vmem>>, vector<1x1x8x8xf32>,
    %32 = vector.extract_strided_slice %9 {offsets = [0, 0, 0], sizes = [1, 8, 8], strides = [1, 1, 1]} : vector<4x8x8xf32> to vector<1x8x8xf32>
    %33 = vector.shape_cast %32 : vector<1x8x8xf32> to vector<8x8xf32>
    %34 = arith.mulf %28, %33 : vector<8x8xf32>
    %35 = arith.truncf %34 : vector<8x8xf32> to vector<8x8xbf16>
    %cst_18 = arith.constant dense<0.000000e+00> : vector<8x8xf32>
    %36 = tpu.matmul %35, %17, %cst_18 {dimension_numbers = #tpu.dot_dimension_numbers<[1], [0], [0], [1], [0, 0, 1, 1], [], []>} : vector<8x8xbf16>, vector<8x8xbf16>, vector<8x8xf32> -> vector<8x8xf32>
    %37 = vector.extract_strided_slice %10 {offsets = [0, 8], sizes = [8, 8], strides = [1, 1]} : vector<8x64xf32> to vector<8x8xf32>
    %38 = arith.truncf %37 : vector<8x8xf32> to vector<8x8xbf16>
    %39 = vector.extract_strided_slice %10 {offsets = [0, 40], sizes = [8, 8], strides = [1, 1]} : vector<8x64xf32> to vector<8x8xf32>
    %40 = arith.truncf %39 : vector<8x8xf32> to vector<8x8xbf16>
    %41 = vector.extract_strided_slice %11 {offsets = [0, 8], sizes = [8, 8], strides = [1, 1]} : vector<8x32xf32> to vector<8x8xf32>
    %42 = arith.truncf %41 : vector<8x8xf32> to vector<8x8xbf16>
    %cst_19 = arith.constant dense<0.000000e+00> : vector<8x8xf32>
    %43 = tpu.matmul %38, %40, %cst_19 {dimension_numbers = #tpu.dot_dimension_numbers<[1], [1], [0], [0], [0, 0, 1, 0], [], []>} : vector<8x8xbf16>, vector<8x8xbf16>, vector<8x8xf32> -> vector<8x8xf32>
    %cst_20 = arith.constant dense<0xFF800000> : vector<8xf32>
    %44 = vector.multi_reduction <maximumf>, %43, %cst_20 [1] : vector<8x8xf32> to vector<8xf32>
    %45 = vector.shape_cast %44 : vector<8xf32> to vector<8x1xf32>
    %46 = vector.broadcast %45 : vector<8x1xf32> to vector<8x8xf32>
    %47 = arith.subf %43, %46 : vector<8x8xf32>
    %48 = math.exp %47 : vector<8x8xf32>
    %cst_21 = arith.constant dense<0.000000e+00> : vector<8xf32>
    %49 = vector.multi_reduction <add>, %48, %cst_21 [1] : vector<8x8xf32> to vector<8xf32>
    %50 = vector.shape_cast %49 : vector<8xf32> to vector<8x1xf32>
    %51 = tpu.reciprocal %50 {approx = true} : vector<8x1xf32> -> vector<8x1xf32>
    %52 = vector.broadcast %51 : vector<8x1xf32> to vector<8x8xf32>
    %53 = arith.mulf %48, %52 : vector<8x8xf32>
    %c0_22 = arith.constant 0 : index
    %c1 = arith.constant 1 : index
    %c0_23 = arith.constant 0 : index
    %c0_24 = arith.constant 0 : index
    %54 = vector.load %arg18[%c0_22, %c1, %c0_23, %c0_24] : memref<2x4x8x8xf32, #tpu.memory_space<vmem>>, vector<1x1x8x8xf32>
    %55 = vector.shape_cast %54 : vector<1x1x8x8xf32> to vector<8x8xf32>
    %56 = vector.shape_cast %53 : vector<8x8xf32> to vector<1x1x8x8xf32>
    tpu.vector_store %arg18[%c0_22, %c1, %c0_23, %c0_24], %56 {strides = array<i32>} : memref<2x4x8x8xf32, #tpu.memory_space<vmem>>, vector<1x1x8x8xf32>,
    %57 = vector.extract_strided_slice %9 {offsets = [1, 0, 0], sizes = [1, 8, 8], strides = [1, 1, 1]} : vector<4x8x8xf32> to vector<1x8x8xf32>
    %58 = vector.shape_cast %57 : vector<1x8x8xf32> to vector<8x8xf32>
    %59 = arith.mulf %53, %58 : vector<8x8xf32>
    %60 = arith.truncf %59 : vector<8x8xf32> to vector<8x8xbf16>
    %cst_25 = arith.constant dense<0.000000e+00> : vector<8x8xf32>
    %61 = tpu.matmul %60, %42, %cst_25 {dimension_numbers = #tpu.dot_dimension_numbers<[1], [0], [0], [1], [0, 0, 1, 1], [], []>} : vector<8x8xbf16>, vector<8x8xbf16>, vector<8x8xf32> -> vector<8x8xf32>
    %62 = vector.extract_strided_slice %10 {offsets = [0, 16], sizes = [8, 8], strides = [1, 1]} : vector<8x64xf32> to vector<8x8xf32>
    %63 = arith.truncf %62 : vector<8x8xf32> to vector<8x8xbf16>
    %64 = vector.extract_strided_slice %10 {offsets = [0, 48], sizes = [8, 8], strides = [1, 1]} : vector<8x64xf32> to vector<8x8xf32>
    %65 = arith.truncf %64 : vector<8x8xf32> to vector<8x8xbf16>
    %66 = vector.extract_strided_slice %11 {offsets = [0, 16], sizes = [8, 8], strides = [1, 1]} : vector<8x32xf32> to vector<8x8xf32>
    %67 = arith.truncf %66 : vector<8x8xf32> to vector<8x8xbf16>
    %cst_26 = arith.constant dense<0.000000e+00> : vector<8x8xf32>
    %68 = tpu.matmul %63, %65, %cst_26 {dimension_numbers = #tpu.dot_dimension_numbers<[1], [1], [0], [0], [0, 0, 1, 0], [], []>} : vector<8x8xbf16>, vector<8x8xbf16>, vector<8x8xf32> -> vector<8x8xf32>
    %cst_27 = arith.constant dense<0xFF800000> : vector<8xf32>
    %69 = vector.multi_reduction <maximumf>, %68, %cst_27 [1] : vector<8x8xf32> to vector<8xf32>
    %70 = vector.shape_cast %69 : vector<8xf32> to vector<8x1xf32>
    %71 = vector.broadcast %70 : vector<8x1xf32> to vector<8x8xf32>
    %72 = arith.subf %68, %71 : vector<8x8xf32>
    %73 = math.exp %72 : vector<8x8xf32>
    %cst_28 = arith.constant dense<0.000000e+00> : vector<8xf32>
    %74 = vector.multi_reduction <add>, %73, %cst_28 [1] : vector<8x8xf32> to vector<8xf32>
    %75 = vector.shape_cast %74 : vector<8xf32> to vector<8x1xf32>
    %76 = tpu.reciprocal %75 {approx = true} : vector<8x1xf32> -> vector<8x1xf32>
    %77 = vector.broadcast %76 : vector<8x1xf32> to vector<8x8xf32>
    %78 = arith.mulf %73, %77 : vector<8x8xf32>
    %c0_29 = arith.constant 0 : index
    %c2 = arith.constant 2 : index
    %c0_30 = arith.constant 0 : index
    %c0_31 = arith.constant 0 : index
    %79 = vector.load %arg18[%c0_29, %c2, %c0_30, %c0_31] : memref<2x4x8x8xf32, #tpu.memory_space<vmem>>, vector<1x1x8x8xf32>
    %80 = vector.shape_cast %79 : vector<1x1x8x8xf32> to vector<8x8xf32>
    %81 = vector.shape_cast %78 : vector<8x8xf32> to vector<1x1x8x8xf32>
    tpu.vector_store %arg18[%c0_29, %c2, %c0_30, %c0_31], %81 {strides = array<i32>} : memref<2x4x8x8xf32, #tpu.memory_space<vmem>>, vector<1x1x8x8xf32>,
    %82 = vector.extract_strided_slice %9 {offsets = [2, 0, 0], sizes = [1, 8, 8], strides = [1, 1, 1]} : vector<4x8x8xf32> to vector<1x8x8xf32>
    %83 = vector.shape_cast %82 : vector<1x8x8xf32> to vector<8x8xf32>
    %84 = arith.mulf %78, %83 : vector<8x8xf32>
    %85 = arith.truncf %84 : vector<8x8xf32> to vector<8x8xbf16>
    %cst_32 = arith.constant dense<0.000000e+00> : vector<8x8xf32>
    %86 = tpu.matmul %85, %67, %cst_32 {dimension_numbers = #tpu.dot_dimension_numbers<[1], [0], [0], [1], [0, 0, 1, 1], [], []>} : vector<8x8xbf16>, vector<8x8xbf16>, vector<8x8xf32> -> vector<8x8xf32>
    %87 = vector.extract_strided_slice %10 {offsets = [0, 24], sizes = [8, 8], strides = [1, 1]} : vector<8x64xf32> to vector<8x8xf32>
    %88 = arith.truncf %87 : vector<8x8xf32> to vector<8x8xbf16>
    %89 = vector.extract_strided_slice %10 {offsets = [0, 56], sizes = [8, 8], strides = [1, 1]} : vector<8x64xf32> to vector<8x8xf32>
    %90 = arith.truncf %89 : vector<8x8xf32> to vector<8x8xbf16>
    %91 = vector.extract_strided_slice %11 {offsets = [0, 24], sizes = [8, 8], strides = [1, 1]} : vector<8x32xf32> to vector<8x8xf32>
    %92 = arith.truncf %91 : vector<8x8xf32> to vector<8x8xbf16>
    %cst_33 = arith.constant dense<0.000000e+00> : vector<8x8xf32>
    %93 = tpu.matmul %88, %90, %cst_33 {dimension_numbers = #tpu.dot_dimension_numbers<[1], [1], [0], [0], [0, 0, 1, 0], [], []>} : vector<8x8xbf16>, vector<8x8xbf16>, vector<8x8xf32> -> vector<8x8xf32>
    %cst_34 = arith.constant dense<0xFF800000> : vector<8xf32>
    %94 = vector.multi_reduction <maximumf>, %93, %cst_34 [1] : vector<8x8xf32> to vector<8xf32>
    %95 = vector.shape_cast %94 : vector<8xf32> to vector<8x1xf32>
    %96 = vector.broadcast %95 : vector<8x1xf32> to vector<8x8xf32>
    %97 = arith.subf %93, %96 : vector<8x8xf32>
    %98 = math.exp %97 : vector<8x8xf32>
    %cst_35 = arith.constant dense<0.000000e+00> : vector<8xf32>
    %99 = vector.multi_reduction <add>, %98, %cst_35 [1] : vector<8x8xf32> to vector<8xf32>
    %100 = vector.shape_cast %99 : vector<8xf32> to vector<8x1xf32>
    %101 = tpu.reciprocal %100 {approx = true} : vector<8x1xf32> -> vector<8x1xf32>
    %102 = vector.broadcast %101 : vector<8x1xf32> to vector<8x8xf32>
    %103 = arith.mulf %98, %102 : vector<8x8xf32>
    %c0_36 = arith.constant 0 : index
    %c3 = arith.constant 3 : index
    %c0_37 = arith.constant 0 : index
    %c0_38 = arith.constant 0 : index
    %104 = vector.load %arg18[%c0_36, %c3, %c0_37, %c0_38] : memref<2x4x8x8xf32, #tpu.memory_space<vmem>>, vector<1x1x8x8xf32>
    %105 = vector.shape_cast %104 : vector<1x1x8x8xf32> to vector<8x8xf32>
    %106 = vector.shape_cast %103 : vector<8x8xf32> to vector<1x1x8x8xf32>
    tpu.vector_store %arg18[%c0_36, %c3, %c0_37, %c0_38], %106 {strides = array<i32>} : memref<2x4x8x8xf32, #tpu.memory_space<vmem>>, vector<1x1x8x8xf32>,
    %107 = vector.extract_strided_slice %9 {offsets = [3, 0, 0], sizes = [1, 8, 8], strides = [1, 1, 1]} : vector<4x8x8xf32> to vector<1x8x8xf32>
    %108 = vector.shape_cast %107 : vector<1x8x8xf32> to vector<8x8xf32>
    %109 = arith.mulf %103, %108 : vector<8x8xf32>
    %110 = arith.truncf %109 : vector<8x8xf32> to vector<8x8xbf16>
    %cst_39 = arith.constant dense<0.000000e+00> : vector<8x8xf32>
    %111 = tpu.matmul %110, %92, %cst_39 {dimension_numbers = #tpu.dot_dimension_numbers<[1], [0], [0], [1], [0, 0, 1, 1], [], []>} : vector<8x8xbf16>, vector<8x8xbf16>, vector<8x8xf32> -> vector<8x8xf32>
    %112 = tpu.concatenate %36, %61, %86, %111 in 1 : vector<8x8xf32>, vector<8x8xf32>, vector<8x8xf32>, vector<8x8xf32> -> vector<8x32xf32>
    %113 = vector.extract_strided_slice %5 {offsets = [8, 0], sizes = [8, 64], strides = [1, 1]} : vector<16x64xf32> to vector<8x64xf32>
    %114 = vector.extract_strided_slice %7 {offsets = [8, 0], sizes = [8, 32], strides = [1, 1]} : vector<16x32xf32> to vector<8x32xf32>
    %115 = vector.extract_strided_slice %113 {offsets = [0, 0], sizes = [8, 8], strides = [1, 1]} : vector<8x64xf32> to vector<8x8xf32>
    %116 = arith.truncf %115 : vector<8x8xf32> to vector<8x8xbf16>
    %117 = vector.extract_strided_slice %113 {offsets = [0, 32], sizes = [8, 8], strides = [1, 1]} : vector<8x64xf32> to vector<8x8xf32>
    %118 = arith.truncf %117 : vector<8x8xf32> to vector<8x8xbf16>
    %119 = vector.extract_strided_slice %114 {offsets = [0, 0], sizes = [8, 8], strides = [1, 1]} : vector<8x32xf32> to vector<8x8xf32>
    %120 = arith.truncf %119 : vector<8x8xf32> to vector<8x8xbf16>
    %cst_40 = arith.constant dense<0.000000e+00> : vector<8x8xf32>
    %121 = tpu.matmul %116, %118, %cst_40 {dimension_numbers = #tpu.dot_dimension_numbers<[1], [1], [0], [0], [0, 0, 1, 0], [], []>} : vector<8x8xbf16>, vector<8x8xbf16>, vector<8x8xf32> -> vector<8x8xf32>
    %cst_41 = arith.constant dense<0xFF800000> : vector<8xf32>
    %122 = vector.multi_reduction <maximumf>, %121, %cst_41 [1] : vector<8x8xf32> to vector<8xf32>
    %123 = vector.shape_cast %122 : vector<8xf32> to vector<8x1xf32>
    %124 = vector.broadcast %123 : vector<8x1xf32> to vector<8x8xf32>
    %125 = arith.subf %121, %124 : vector<8x8xf32>
    %126 = math.exp %125 : vector<8x8xf32>
    %cst_42 = arith.constant dense<0.000000e+00> : vector<8xf32>
    %127 = vector.multi_reduction <add>, %126, %cst_42 [1] : vector<8x8xf32> to vector<8xf32>
    %128 = vector.shape_cast %127 : vector<8xf32> to vector<8x1xf32>
    %129 = tpu.reciprocal %128 {approx = true} : vector<8x1xf32> -> vector<8x1xf32>
    %130 = vector.broadcast %129 : vector<8x1xf32> to vector<8x8xf32>
    %131 = arith.mulf %126, %130 : vector<8x8xf32>
    %c1_43 = arith.constant 1 : index
    %c0_44 = arith.constant 0 : index
    %c0_45 = arith.constant 0 : index
    %c0_46 = arith.constant 0 : index
    %132 = vector.load %arg18[%c1_43, %c0_44, %c0_45, %c0_46] : memref<2x4x8x8xf32, #tpu.memory_space<vmem>>, vector<1x1x8x8xf32>
    %133 = vector.shape_cast %132 : vector<1x1x8x8xf32> to vector<8x8xf32>
    %134 = vector.shape_cast %131 : vector<8x8xf32> to vector<1x1x8x8xf32>
    tpu.vector_store %arg18[%c1_43, %c0_44, %c0_45, %c0_46], %134 {strides = array<i32>} : memref<2x4x8x8xf32, #tpu.memory_space<vmem>>, vector<1x1x8x8xf32>,
    %135 = vector.extract_strided_slice %9 {offsets = [0, 0, 0], sizes = [1, 8, 8], strides = [1, 1, 1]} : vector<4x8x8xf32> to vector<1x8x8xf32>
    %136 = vector.shape_cast %135 : vector<1x8x8xf32> to vector<8x8xf32>
    %137 = arith.mulf %131, %136 : vector<8x8xf32>
    %138 = arith.truncf %137 : vector<8x8xf32> to vector<8x8xbf16>
    %cst_47 = arith.constant dense<0.000000e+00> : vector<8x8xf32>
    %139 = tpu.matmul %138, %120, %cst_47 {dimension_numbers = #tpu.dot_dimension_numbers<[1], [0], [0], [1], [0, 0, 1, 1], [], []>} : vector<8x8xbf16>, vector<8x8xbf16>, vector<8x8xf32> -> vector<8x8xf32>
    %140 = vector.extract_strided_slice %113 {offsets = [0, 8], sizes = [8, 8], strides = [1, 1]} : vector<8x64xf32> to vector<8x8xf32>
    %141 = arith.truncf %140 : vector<8x8xf32> to vector<8x8xbf16>
    %142 = vector.extract_strided_slice %113 {offsets = [0, 40], sizes = [8, 8], strides = [1, 1]} : vector<8x64xf32> to vector<8x8xf32>
    %143 = arith.truncf %142 : vector<8x8xf32> to vector<8x8xbf16>
    %144 = vector.extract_strided_slice %114 {offsets = [0, 8], sizes = [8, 8], strides = [1, 1]} : vector<8x32xf32> to vector<8x8xf32>
    %145 = arith.truncf %144 : vector<8x8xf32> to vector<8x8xbf16>
    %cst_48 = arith.constant dense<0.000000e+00> : vector<8x8xf32>
    %146 = tpu.matmul %141, %143, %cst_48 {dimension_numbers = #tpu.dot_dimension_numbers<[1], [1], [0], [0], [0, 0, 1, 0], [], []>} : vector<8x8xbf16>, vector<8x8xbf16>, vector<8x8xf32> -> vector<8x8xf32>
    %cst_49 = arith.constant dense<0xFF800000> : vector<8xf32>
    %147 = vector.multi_reduction <maximumf>, %146, %cst_49 [1] : vector<8x8xf32> to vector<8xf32>
    %148 = vector.shape_cast %147 : vector<8xf32> to vector<8x1xf32>
    %149 = vector.broadcast %148 : vector<8x1xf32> to vector<8x8xf32>
    %150 = arith.subf %146, %149 : vector<8x8xf32>
    %151 = math.exp %150 : vector<8x8xf32>
    %cst_50 = arith.constant dense<0.000000e+00> : vector<8xf32>
    %152 = vector.multi_reduction <add>, %151, %cst_50 [1] : vector<8x8xf32> to vector<8xf32>
    %153 = vector.shape_cast %152 : vector<8xf32> to vector<8x1xf32>
    %154 = tpu.reciprocal %153 {approx = true} : vector<8x1xf32> -> vector<8x1xf32>
    %155 = vector.broadcast %154 : vector<8x1xf32> to vector<8x8xf32>
    %156 = arith.mulf %151, %155 : vector<8x8xf32>
    %c1_51 = arith.constant 1 : index
    %c1_52 = arith.constant 1 : index
    %c0_53 = arith.constant 0 : index
    %c0_54 = arith.constant 0 : index
    %157 = vector.load %arg18[%c1_51, %c1_52, %c0_53, %c0_54] : memref<2x4x8x8xf32, #tpu.memory_space<vmem>>, vector<1x1x8x8xf32>
    %158 = vector.shape_cast %157 : vector<1x1x8x8xf32> to vector<8x8xf32>
    %159 = vector.shape_cast %156 : vector<8x8xf32> to vector<1x1x8x8xf32>
    tpu.vector_store %arg18[%c1_51, %c1_52, %c0_53, %c0_54], %159 {strides = array<i32>} : memref<2x4x8x8xf32, #tpu.memory_space<vmem>>, vector<1x1x8x8xf32>,
    %160 = vector.extract_strided_slice %9 {offsets = [1, 0, 0], sizes = [1, 8, 8], strides = [1, 1, 1]} : vector<4x8x8xf32> to vector<1x8x8xf32>
    %161 = vector.shape_cast %160 : vector<1x8x8xf32> to vector<8x8xf32>
    %162 = arith.mulf %156, %161 : vector<8x8xf32>
    %163 = arith.truncf %162 : vector<8x8xf32> to vector<8x8xbf16>
    %cst_55 = arith.constant dense<0.000000e+00> : vector<8x8xf32>
    %164 = tpu.matmul %163, %145, %cst_55 {dimension_numbers = #tpu.dot_dimension_numbers<[1], [0], [0], [1], [0, 0, 1, 1], [], []>} : vector<8x8xbf16>, vector<8x8xbf16>, vector<8x8xf32> -> vector<8x8xf32>
    %165 = vector.extract_strided_slice %113 {offsets = [0, 16], sizes = [8, 8], strides = [1, 1]} : vector<8x64xf32> to vector<8x8xf32>
    %166 = arith.truncf %165 : vector<8x8xf32> to vector<8x8xbf16>
    %167 = vector.extract_strided_slice %113 {offsets = [0, 48], sizes = [8, 8], strides = [1, 1]} : vector<8x64xf32> to vector<8x8xf32>
    %168 = arith.truncf %167 : vector<8x8xf32> to vector<8x8xbf16>
    %169 = vector.extract_strided_slice %114 {offsets = [0, 16], sizes = [8, 8], strides = [1, 1]} : vector<8x32xf32> to vector<8x8xf32>
    %170 = arith.truncf %169 : vector<8x8xf32> to vector<8x8xbf16>
    %cst_56 = arith.constant dense<0.000000e+00> : vector<8x8xf32>
    %171 = tpu.matmul %166, %168, %cst_56 {dimension_numbers = #tpu.dot_dimension_numbers<[1], [1], [0], [0], [0, 0, 1, 0], [], []>} : vector<8x8xbf16>, vector<8x8xbf16>, vector<8x8xf32> -> vector<8x8xf32>
    %cst_57 = arith.constant dense<0xFF800000> : vector<8xf32>
    %172 = vector.multi_reduction <maximumf>, %171, %cst_57 [1] : vector<8x8xf32> to vector<8xf32>
    %173 = vector.shape_cast %172 : vector<8xf32> to vector<8x1xf32>
    %174 = vector.broadcast %173 : vector<8x1xf32> to vector<8x8xf32>
    %175 = arith.subf %171, %174 : vector<8x8xf32>
    %176 = math.exp %175 : vector<8x8xf32>
    %cst_58 = arith.constant dense<0.000000e+00> : vector<8xf32>
    %177 = vector.multi_reduction <add>, %176, %cst_58 [1] : vector<8x8xf32> to vector<8xf32>
    %178 = vector.shape_cast %177 : vector<8xf32> to vector<8x1xf32>
    %179 = tpu.reciprocal %178 {approx = true} : vector<8x1xf32> -> vector<8x1xf32>
    %180 = vector.broadcast %179 : vector<8x1xf32> to vector<8x8xf32>
    %181 = arith.mulf %176, %180 : vector<8x8xf32>
    %c1_59 = arith.constant 1 : index
    %c2_60 = arith.constant 2 : index
    %c0_61 = arith.constant 0 : index
    %c0_62 = arith.constant 0 : index
    %182 = vector.load %arg18[%c1_59, %c2_60, %c0_61, %c0_62] : memref<2x4x8x8xf32, #tpu.memory_space<vmem>>, vector<1x1x8x8xf32>
    %183 = vector.shape_cast %182 : vector<1x1x8x8xf32> to vector<8x8xf32>
    %184 = vector.shape_cast %181 : vector<8x8xf32> to vector<1x1x8x8xf32>
    tpu.vector_store %arg18[%c1_59, %c2_60, %c0_61, %c0_62], %184 {strides = array<i32>} : memref<2x4x8x8xf32, #tpu.memory_space<vmem>>, vector<1x1x8x8xf32>,
    %185 = vector.extract_strided_slice %9 {offsets = [2, 0, 0], sizes = [1, 8, 8], strides = [1, 1, 1]} : vector<4x8x8xf32> to vector<1x8x8xf32>
    %186 = vector.shape_cast %185 : vector<1x8x8xf32> to vector<8x8xf32>
    %187 = arith.mulf %181, %186 : vector<8x8xf32>
    %188 = arith.truncf %187 : vector<8x8xf32> to vector<8x8xbf16>
    %cst_63 = arith.constant dense<0.000000e+00> : vector<8x8xf32>
    %189 = tpu.matmul %188, %170, %cst_63 {dimension_numbers = #tpu.dot_dimension_numbers<[1], [0], [0], [1], [0, 0, 1, 1], [], []>} : vector<8x8xbf16>, vector<8x8xbf16>, vector<8x8xf32> -> vector<8x8xf32>
    %190 = vector.extract_strided_slice %113 {offsets = [0, 24], sizes = [8, 8], strides = [1, 1]} : vector<8x64xf32> to vector<8x8xf32>
    %191 = arith.truncf %190 : vector<8x8xf32> to vector<8x8xbf16>
    %192 = vector.extract_strided_slice %113 {offsets = [0, 56], sizes = [8, 8], strides = [1, 1]} : vector<8x64xf32> to vector<8x8xf32>
    %193 = arith.truncf %192 : vector<8x8xf32> to vector<8x8xbf16>
    %194 = vector.extract_strided_slice %114 {offsets = [0, 24], sizes = [8, 8], strides = [1, 1]} : vector<8x32xf32> to vector<8x8xf32>
    %195 = arith.truncf %194 : vector<8x8xf32> to vector<8x8xbf16>
    %cst_64 = arith.constant dense<0.000000e+00> : vector<8x8xf32>
    %196 = tpu.matmul %191, %193, %cst_64 {dimension_numbers = #tpu.dot_dimension_numbers<[1], [1], [0], [0], [0, 0, 1, 0], [], []>} : vector<8x8xbf16>, vector<8x8xbf16>, vector<8x8xf32> -> vector<8x8xf32>
    %cst_65 = arith.constant dense<0xFF800000> : vector<8xf32>
    %197 = vector.multi_reduction <maximumf>, %196, %cst_65 [1] : vector<8x8xf32> to vector<8xf32>
    %198 = vector.shape_cast %197 : vector<8xf32> to vector<8x1xf32>
    %199 = vector.broadcast %198 : vector<8x1xf32> to vector<8x8xf32>
    %200 = arith.subf %196, %199 : vector<8x8xf32>
    %201 = math.exp %200 : vector<8x8xf32>
    %cst_66 = arith.constant dense<0.000000e+00> : vector<8xf32>
    %202 = vector.multi_reduction <add>, %201, %cst_66 [1] : vector<8x8xf32> to vector<8xf32>
    %203 = vector.shape_cast %202 : vector<8xf32> to vector<8x1xf32>
    %204 = tpu.reciprocal %203 {approx = true} : vector<8x1xf32> -> vector<8x1xf32>
    %205 = vector.broadcast %204 : vector<8x1xf32> to vector<8x8xf32>
    %206 = arith.mulf %201, %205 : vector<8x8xf32>
    %c1_67 = arith.constant 1 : index
    %c3_68 = arith.constant 3 : index
    %c0_69 = arith.constant 0 : index
    %c0_70 = arith.constant 0 : index
    %207 = vector.load %arg18[%c1_67, %c3_68, %c0_69, %c0_70] : memref<2x4x8x8xf32, #tpu.memory_space<vmem>>, vector<1x1x8x8xf32>
    %208 = vector.shape_cast %207 : vector<1x1x8x8xf32> to vector<8x8xf32>
    %209 = vector.shape_cast %206 : vector<8x8xf32> to vector<1x1x8x8xf32>
    tpu.vector_store %arg18[%c1_67, %c3_68, %c0_69, %c0_70], %209 {strides = array<i32>} : memref<2x4x8x8xf32, #tpu.memory_space<vmem>>, vector<1x1x8x8xf32>,
    %210 = vector.extract_strided_slice %9 {offsets = [3, 0, 0], sizes = [1, 8, 8], strides = [1, 1, 1]} : vector<4x8x8xf32> to vector<1x8x8xf32>
    %211 = vector.shape_cast %210 : vector<1x8x8xf32> to vector<8x8xf32>
    %212 = arith.mulf %206, %211 : vector<8x8xf32>
    %213 = arith.truncf %212 : vector<8x8xf32> to vector<8x8xbf16>
    %cst_71 = arith.constant dense<0.000000e+00> : vector<8x8xf32>
    %214 = tpu.matmul %213, %195, %cst_71 {dimension_numbers = #tpu.dot_dimension_numbers<[1], [0], [0], [1], [0, 0, 1, 1], [], []>} : vector<8x8xbf16>, vector<8x8xbf16>, vector<8x8xf32> -> vector<8x8xf32>
    %215 = tpu.concatenate %139, %164, %189, %214 in 1 : vector<8x8xf32>, vector<8x8xf32>, vector<8x8xf32>, vector<8x8xf32> -> vector<8x32xf32>
    %216 = tpu.concatenate %112, %215 in 0 : vector<8x32xf32>, vector<8x32xf32> -> vector<16x32xf32>
    %217 = arith.truncf %216 : vector<16x32xf32> to vector<16x32xbf16>
    %c0_72 = arith.constant 0 : index
    %c0_73 = arith.constant 0 : index
    %218 = vector.load %arg6[%c0_72, %c0_73] : memref<32x32xbf16, #tpu.memory_space<vmem>>, vector<32x32xbf16>
    %cst_74 = arith.constant dense<0.000000e+00> : vector<16x32xf32>
    %219 = tpu.matmul %217, %218, %cst_74 {dimension_numbers = #tpu.dot_dimension_numbers<[1], [0], [0], [1], [0, 0, 1, 1], [], []>} : vector<16x32xbf16>, vector<32x32xbf16>, vector<16x32xf32> -> vector<16x32xf32>
    %220 = arith.addf %219, %1 : vector<16x32xf32>
    %c0_75 = arith.constant 0 : index
    %c0_76 = arith.constant 0 : index
    %221 = vector.load %arg7[%c0_75, %c0_76] : memref<1x32xf32, #tpu.memory_space<vmem>>, vector<1x32xf32>
    %c0_77 = arith.constant 0 : index
    %c0_78 = arith.constant 0 : index
    %222 = vector.load %arg8[%c0_77, %c0_78] : memref<1x32xf32, #tpu.memory_space<vmem>>, vector<1x32xf32>
    %cst_79 = arith.constant dense<0.000000e+00> : vector<16xf32>
    %223 = vector.multi_reduction <add>, %220, %cst_79 [1] : vector<16x32xf32> to vector<16xf32>
    %224 = vector.shape_cast %223 : vector<16xf32> to vector<16x1xf32>
    %cst_80 = arith.constant 3.200000e+01 : f32
    %225 = vector.broadcast %cst_80 : f32 to vector<16x1xf32>
    %226 = arith.divf %224, %225 : vector<16x1xf32>
    %227 = vector.broadcast %226 : vector<16x1xf32> to vector<16x32xf32>
    %228 = arith.subf %220, %227 : vector<16x32xf32>
    %229 = arith.mulf %228, %228 : vector<16x32xf32>
    %cst_81 = arith.constant dense<0.000000e+00> : vector<16xf32>
    %230 = vector.multi_reduction <add>, %229, %cst_81 [1] : vector<16x32xf32> to vector<16xf32>
    %231 = vector.shape_cast %230 : vector<16xf32> to vector<16x1xf32>
    %cst_82 = arith.constant 3.200000e+01 : f32
    %232 = vector.broadcast %cst_82 : f32 to vector<16x1xf32>
    %233 = arith.divf %231, %232 : vector<16x1xf32>
    %234 = vector.broadcast %226 : vector<16x1xf32> to vector<16x32xf32>
    %235 = arith.subf %220, %234 : vector<16x32xf32>
    %cst_83 = arith.constant 9.99999997E-7 : f32
    %236 = vector.broadcast %cst_83 : f32 to vector<16x1xf32>
    %237 = arith.addf %233, %236 : vector<16x1xf32>
    %238 = math.rsqrt %237 : vector<16x1xf32>
    %239 = vector.broadcast %238 : vector<16x1xf32> to vector<16x32xf32>
    %240 = arith.mulf %235, %239 : vector<16x32xf32>
    %241 = vector.broadcast %221 : vector<1x32xf32> to vector<16x32xf32>
    %242 = arith.mulf %240, %241 : vector<16x32xf32>
    %243 = vector.broadcast %222 : vector<1x32xf32> to vector<16x32xf32>
    %244 = arith.addf %242, %243 : vector<16x32xf32>
    %245 = arith.addf %0, %244 : vector<16x32xf32>
    %c0_84 = arith.constant 0 : index
    %c0_85 = arith.constant 0 : index
    %246 = vector.load %arg9[%c0_84, %c0_85] : memref<1x32xf32, #tpu.memory_space<vmem>>, vector<1x32xf32>
    %c0_86 = arith.constant 0 : index
    %c0_87 = arith.constant 0 : index
    %247 = vector.load %arg10[%c0_86, %c0_87] : memref<1x32xf32, #tpu.memory_space<vmem>>, vector<1x32xf32>
    %cst_88 = arith.constant dense<0.000000e+00> : vector<16xf32>
    %248 = vector.multi_reduction <add>, %245, %cst_88 [1] : vector<16x32xf32> to vector<16xf32>
    %249 = vector.shape_cast %248 : vector<16xf32> to vector<16x1xf32>
    %cst_89 = arith.constant 3.200000e+01 : f32
    %250 = vector.broadcast %cst_89 : f32 to vector<16x1xf32>
    %251 = arith.divf %249, %250 : vector<16x1xf32>
    %252 = vector.broadcast %251 : vector<16x1xf32> to vector<16x32xf32>
    %253 = arith.subf %245, %252 : vector<16x32xf32>
    %254 = arith.mulf %253, %253 : vector<16x32xf32>
    %cst_90 = arith.constant dense<0.000000e+00> : vector<16xf32>
    %255 = vector.multi_reduction <add>, %254, %cst_90 [1] : vector<16x32xf32> to vector<16xf32>
    %256 = vector.shape_cast %255 : vector<16xf32> to vector<16x1xf32>
    %cst_91 = arith.constant 3.200000e+01 : f32
    %257 = vector.broadcast %cst_91 : f32 to vector<16x1xf32>
    %258 = arith.divf %256, %257 : vector<16x1xf32>
    %259 = vector.broadcast %251 : vector<16x1xf32> to vector<16x32xf32>
    %260 = arith.subf %245, %259 : vector<16x32xf32>
    %cst_92 = arith.constant 9.99999974E-6 : f32
    %261 = vector.broadcast %cst_92 : f32 to vector<16x1xf32>
    %262 = arith.addf %258, %261 : vector<16x1xf32>
    %263 = math.rsqrt %262 : vector<16x1xf32>
    %264 = vector.broadcast %263 : vector<16x1xf32> to vector<16x32xf32>
    %265 = arith.mulf %260, %264 : vector<16x32xf32>
    %266 = vector.broadcast %246 : vector<1x32xf32> to vector<16x32xf32>
    %267 = arith.mulf %265, %266 : vector<16x32xf32>
    %268 = vector.broadcast %247 : vector<1x32xf32> to vector<16x32xf32>
    %269 = arith.addf %267, %268 : vector<16x32xf32>
    %270 = arith.truncf %269 : vector<16x32xf32> to vector<16x32xbf16>
    %c0_93 = arith.constant 0 : index
    %c0_94 = arith.constant 0 : index
    %271 = vector.load %arg13[%c0_93, %c0_94] : memref<32x64xbf16, #tpu.memory_space<vmem>>, vector<32x64xbf16>
    %cst_95 = arith.constant dense<0.000000e+00> : vector<16x64xf32>
    %272 = tpu.matmul %270, %271, %cst_95 {dimension_numbers = #tpu.dot_dimension_numbers<[1], [0], [0], [1], [0, 0, 1, 1], [], []>} : vector<16x32xbf16>, vector<32x64xbf16>, vector<16x64xf32> -> vector<16x64xf32>
    %c0_96 = arith.constant 0 : index
    %c0_97 = arith.constant 0 : index
    %273 = vector.load %arg14[%c0_96, %c0_97] : memref<1x64xf32, #tpu.memory_space<vmem>>, vector<1x64xf32>
    %274 = vector.broadcast %273 : vector<1x64xf32> to vector<16x64xf32>
    %275 = arith.addf %272, %274 : vector<16x64xf32>
    %cst_98 = arith.constant 0.000000e+00 : f32
    %276 = vector.broadcast %cst_98 : f32 to vector<16x64xf32>
    %277 = arith.maximumf %275, %276 : vector<16x64xf32>
    %278 = arith.truncf %277 : vector<16x64xf32> to vector<16x64xbf16>
    %c0_99 = arith.constant 0 : index
    %c0_100 = arith.constant 0 : index
    %279 = vector.load %arg15[%c0_99, %c0_100] : memref<64x32xbf16, #tpu.memory_space<vmem>>, vector<64x32xbf16>
    %cst_101 = arith.constant dense<0.000000e+00> : vector<16x32xf32>
    %280 = tpu.matmul %278, %279, %cst_101 {dimension_numbers = #tpu.dot_dimension_numbers<[1], [0], [0], [1], [0, 0, 1, 1], [], []>} : vector<16x64xbf16>, vector<64x32xbf16>, vector<16x32xf32> -> vector<16x32xf32>
    %c0_102 = arith.constant 0 : index
    %c0_103 = arith.constant 0 : index
    %281 = vector.load %arg16[%c0_102, %c0_103] : memref<1x32xf32, #tpu.memory_space<vmem>>, vector<1x32xf32>
    %282 = vector.broadcast %281 : vector<1x32xf32> to vector<16x32xf32>
    %283 = arith.addf %280, %282 : vector<16x32xf32>
    %284 = arith.addf %269, %283 : vector<16x32xf32>
    %c0_104 = arith.constant 0 : index
    %c0_105 = arith.constant 0 : index
    %285 = vector.load %arg11[%c0_104, %c0_105] : memref<1x32xf32, #tpu.memory_space<vmem>>, vector<1x32xf32>
    %c0_106 = arith.constant 0 : index
    %c0_107 = arith.constant 0 : index
    %286 = vector.load %arg12[%c0_106, %c0_107] : memref<1x32xf32, #tpu.memory_space<vmem>>, vector<1x32xf32>
    %cst_108 = arith.constant dense<0.000000e+00> : vector<16xf32>
    %287 = vector.multi_reduction <add>, %284, %cst_108 [1] : vector<16x32xf32> to vector<16xf32>
    %288 = vector.shape_cast %287 : vector<16xf32> to vector<16x1xf32>
    %cst_109 = arith.constant 3.200000e+01 : f32
    %289 = vector.broadcast %cst_109 : f32 to vector<16x1xf32>
    %290 = arith.divf %288, %289 : vector<16x1xf32>
    %291 = vector.broadcast %290 : vector<16x1xf32> to vector<16x32xf32>
    %292 = arith.subf %284, %291 : vector<16x32xf32>
    %293 = arith.mulf %292, %292 : vector<16x32xf32>
    %cst_110 = arith.constant dense<0.000000e+00> : vector<16xf32>
    %294 = vector.multi_reduction <add>, %293, %cst_110 [1] : vector<16x32xf32> to vector<16xf32>
    %295 = vector.shape_cast %294 : vector<16xf32> to vector<16x1xf32>
    %cst_111 = arith.constant 3.200000e+01 : f32
    %296 = vector.broadcast %cst_111 : f32 to vector<16x1xf32>
    %297 = arith.divf %295, %296 : vector<16x1xf32>
    %298 = vector.broadcast %290 : vector<16x1xf32> to vector<16x32xf32>
    %299 = arith.subf %284, %298 : vector<16x32xf32>
    %cst_112 = arith.constant 9.99999974E-6 : f32
    %300 = vector.broadcast %cst_112 : f32 to vector<16x1xf32>
    %301 = arith.addf %297, %300 : vector<16x1xf32>
    %302 = math.rsqrt %301 : vector<16x1xf32>
    %303 = vector.broadcast %302 : vector<16x1xf32> to vector<16x32xf32>
    %304 = arith.mulf %299, %303 : vector<16x32xf32>
    %305 = vector.broadcast %285 : vector<1x32xf32> to vector<16x32xf32>
    %306 = arith.mulf %304, %305 : vector<16x32xf32>
    %307 = vector.broadcast %286 : vector<1x32xf32> to vector<16x32xf32>
    %308 = arith.addf %306, %307 : vector<16x32xf32>
    %c0_113 = arith.constant 0 : index
    %c0_114 = arith.constant 0 : index
    %309 = vector.load %arg17[%c0_113, %c0_114] : memref<16x32xf32, #tpu.memory_space<vmem>>, vector<16x32xf32>
    tpu.vector_store %arg17[%c0_113, %c0_114], %308 {strides = array<i32>} : memref<16x32xf32, #tpu.memory_space<vmem>>, vector<16x32xf32>,
    return
  }
  func.func @transform_0(%arg0: i32) -> (i32, i32) {
    %c0_i32 = arith.constant 0 : i32
    %c0_i32_0 = arith.constant 0 : i32
    return %arg0, %c0_i32 : i32, i32
  }
  func.func @transform_1(%arg0: i32) -> (i32, i32) {
    %c0_i32 = arith.constant 0 : i32
    %c0_i32_0 = arith.constant 0 : i32
    return %arg0, %c0_i32 : i32, i32
  }
  func.func @transform_2(%arg0: i32) -> (i32, i32, i32) {
    %c0_i32 = arith.constant 0 : i32
    %c0_i32_0 = arith.constant 0 : i32
    %c0_i32_1 = arith.constant 0 : i32
    %c0_i32_2 = arith.constant 0 : i32
    return %c0_i32, %c0_i32_0, %c0_i32_1 : i32, i32, i32
  }
  func.func @transform_3(%arg0: i32) -> (i32, i32) {
    %c0_i32 = arith.constant 0 : i32
    %c0_i32_0 = arith.constant 0 : i32
    %c0_i32_1 = arith.constant 0 : i32
    return %c0_i32, %c0_i32_0 : i32, i32
  }
  func.func @transform_4(%arg0: i32) -> (i32, i32) {
    %c0_i32 = arith.constant 0 : i32
    %c0_i32_0 = arith.constant 0 : i32
    %c0_i32_1 = arith.constant 0 : i32
    return %c0_i32, %c0_i32_0 : i32, i32
  }
  func.func @transform_5(%arg0: i32) -> (i32, i32) {
    %c0_i32 = arith.constant 0 : i32
    %c0_i32_0 = arith.constant 0 : i32
    %c0_i32_1 = arith.constant 0 : i32
    return %c0_i32, %c0_i32_0 : i32, i32
  }
  func.func @transform_6(%arg0: i32) -> (i32, i32) {
    %c0_i32 = arith.constant 0 : i32
    %c0_i32_0 = arith.constant 0 : i32
    %c0_i32_1 = arith.constant 0 : i32
    return %c0_i32, %c0_i32_0 : i32, i32
  }
  func.func @transform_7(%arg0: i32) -> (i32, i32) {
    %c0_i32 = arith.constant 0 : i32
    %c0_i32_0 = arith.constant 0 : i32
    %c0_i32_1 = arith.constant 0 : i32
    return %c0_i32, %c0_i32_0 : i32, i32
  }
  func.func @transform_8(%arg0: i32) -> (i32, i32) {
    %c0_i32 = arith.constant 0 : i32
    %c0_i32_0 = arith.constant 0 : i32
    %c0_i32_1 = arith.constant 0 : i32
    return %c0_i32, %c0_i32_0 : i32, i32
  }
  func.func @transform_9(%arg0: i32) -> (i32, i32) {
    %c0_i32 = arith.constant 0 : i32
    %c0_i32_0 = arith.constant 0 : i32
    %c0_i32_1 = arith.constant 0 : i32
    return %c0_i32, %c0_i32_0 : i32, i32
  }
  func.func @transform_10(%arg0: i32) -> (i32, i32) {
    %c0_i32 = arith.constant 0 : i32
    %c0_i32_0 = arith.constant 0 : i32
    %c0_i32_1 = arith.constant 0 : i32
    return %c0_i32, %c0_i32_0 : i32, i32
  }
  func.func @transform_11(%arg0: i32) -> (i32, i32) {
    %c0_i32 = arith.constant 0 : i32
    %c0_i32_0 = arith.constant 0 : i32
    %c0_i32_1 = arith.constant 0 : i32
    return %c0_i32, %c0_i32_0 : i32, i32
  }
  func.func @transform_12(%arg0: i32) -> (i32, i32) {
    %c0_i32 = arith.constant 0 : i32
    %c0_i32_0 = arith.constant 0 : i32
    %c0_i32_1 = arith.constant 0 : i32
    return %c0_i32, %c0_i32_0 : i32, i32
  }
  func.func @transform_13(%arg0: i32) -> (i32, i32) {
    %c0_i32 = arith.constant 0 : i32
    %c0_i32_0 = arith.constant 0 : i32
    %c0_i32_1 = arith.constant 0 : i32
    return %c0_i32, %c0_i32_0 : i32, i32
  }
  func.func @transform_14(%arg0: i32) -> (i32, i32) {
    %c0_i32 = arith.constant 0 : i32
    %c0_i32_0 = arith.constant 0 : i32
    %c0_i32_1 = arith.constant 0 : i32
    return %c0_i32, %c0_i32_0 : i32, i32
  }
  func.func @transform_15(%arg0: i32) -> (i32, i32) {
    %c0_i32 = arith.constant 0 : i32
    %c0_i32_0 = arith.constant 0 : i32
    %c0_i32_1 = arith.constant 0 : i32
    return %c0_i32, %c0_i32_0 : i32, i32
  }
  func.func @transform_16(%arg0: i32) -> (i32, i32) {
    %c0_i32 = arith.constant 0 : i32
    %c0_i32_0 = arith.constant 0 : i32
    return %arg0, %c0_i32 : i32, i32
  }
  func.func @transform_17(%arg0: i32) -> (i32, i32, i32, i32) {
    %c0_i32 = arith.constant 0 : i32
    %c0_i32_0 = arith.constant 0 : i32
    %c0_i32_1 = arith.constant 0 : i32
    %c0_i32_2 = arith.constant 0 : i32
    return %arg0, %c0_i32, %c0_i32_0, %c0_i32_1 : i32, i32, i32, i32
  }
}

</mosaic_0001>

<llo_original>
// kernel: tpu_custom_call.1
$region0: #{tpu_custom_call.1}
  #allocation0 [shape = 'u32[]', space=smem, size = 0x4, offset = 0x4, fixed_abs, tag = 'smem constant byte address 0x4 - core index']
  #allocation1 [shape = 'u32[144,128]{1,0:T(1,128)}', space=vmem, size = 0x12000, scoped, tag = 'internal scratch']
  %s0 = inlined_call_operand.hbm [shape: f32[16,32], index: 0, kind: input, shape index: {}]
  %s1 = inlined_call_operand.hbm [shape: f32[16,32], index: 1, kind: input, shape index: {}]
  %s2 = inlined_call_operand.hbm [shape: bf16[4,8,8], index: 2, kind: input, shape index: {}]
  %s3 = inlined_call_operand.hbm [shape: bf16[32,64], index: 3, kind: input, shape index: {}]
  %s4 = inlined_call_operand.hbm [shape: bf16[32,32], index: 4, kind: input, shape index: {}]
  %s5 = inlined_call_operand.hbm [shape: bf16[32,32], index: 5, kind: input, shape index: {}]
  %s6 = inlined_call_operand.hbm [shape: f32[1,32], index: 6, kind: input, shape index: {}]
  %s7 = inlined_call_operand.hbm [shape: f32[1,32], index: 7, kind: input, shape index: {}]
  %s8 = inlined_call_operand.hbm [shape: f32[1,32], index: 8, kind: input, shape index: {}]
  %s9 = inlined_call_operand.hbm [shape: f32[1,32], index: 9, kind: input, shape index: {}]
  %s10 = inlined_call_operand.hbm [shape: f32[1,32], index: 10, kind: input, shape index: {}]
  %s11 = inlined_call_operand.hbm [shape: f32[1,32], index: 11, kind: input, shape index: {}]
  %s12 = inlined_call_operand.hbm [shape: bf16[32,64], index: 12, kind: input, shape index: {}]
  %s13 = inlined_call_operand.hbm [shape: f32[1,64], index: 13, kind: input, shape index: {}]
  %s14 = inlined_call_operand.hbm [shape: bf16[64,32], index: 14, kind: input, shape index: {}]
  %s15 = inlined_call_operand.hbm [shape: f32[1,32], index: 15, kind: input, shape index: {}]
  %s16 = inlined_call_operand.hbm [shape: f32[16,32], index: 16, kind: output, shape index: {0}]
  %s17 = inlined_call_operand.hbm [shape: f32[2,4,8,8], index: 17, kind: output, shape index: {1}]
  %18 = xla_tuple %s16, %s17
  %s19 = sld [smem:[#allocation0]]
  $region146: #{tpu_custom_call.1} parent=0
    _
  %s21 = ssub.s32 1, %s19
  %s22 = scalar_select 0, %s21, %s19
  $region1: #{tpu_custom_call.1} parent=0
    #allocation2 [shape = 'u8[8192]{0}', space=vmem, size = 0x2000, scoped, tag = 'input window, operand 0, single buffered']
    #allocation3 [shape = 's32[1]{0}', space=sflag, size = 0x4, scoped, tag = 'scoped memory for tpu_custom_call.1']
    #allocation4 [shape = 's32[1]{0}', space=sflag, size = 0x4, scoped, tag = 'scoped memory for tpu_custom_call.1']
    #allocation5 [shape = 'u8[8192]{0}', space=vmem, size = 0x2000, scoped, tag = 'input window, operand 1, single buffered']
    #allocation6 [shape = 's32[1]{0}', space=sflag, size = 0x4, scoped, tag = 'scoped memory for tpu_custom_call.1']
    #allocation7 [shape = 'u8[8192]{0}', space=vmem, size = 0x2000, scoped, tag = 'input window, operand 2, single buffered']
    #allocation8 [shape = 'u8[8192]{0}', space=vmem, size = 0x2000, scoped, tag = 'input window, operand 3, single buffered']
    #allocation9 [shape = 's32[1]{0}', space=sflag, size = 0x4, scoped, tag = 'scoped memory for tpu_custom_call.1']
    #allocation10 [shape = 'u8[8192]{0}', space=vmem, size = 0x2000, scoped, tag = 'input window, operand 4, single buffered']
    #allocation11 [shape = 'u8[8192]{0}', space=vmem, size = 0x2000, scoped, tag = 'input window, operand 5, single buffered']
    #allocation12 [shape = 's32[1]{0}', space=sflag, size = 0x4, scoped, tag = 'scoped memory for tpu_custom_call.1']
    #allocation13 [shape = 'u8[512]{0}', space=vmem, size = 0x400, scoped, tag = 'input window, operand 6, single buffered']
    #allocation14 [shape = 'u8[512]{0}', space=vmem, size = 0x400, scoped, tag = 'input window, operand 7, single buffered']
    #allocation15 [shape = 's32[1]{0}', space=sflag, size = 0x4, scoped, tag = 'scoped memory for tpu_custom_call.1']
    #allocation16 [shape = 'u8[512]{0}', space=vmem, size = 0x400, scoped, tag = 'input window, operand 8, single buffered']
    #allocation17 [shape = 'u8[512]{0}', space=vmem, size = 0x400, scoped, tag = 'input window, operand 9, single buffered']
    #allocation18 [shape = 's32[1]{0}', space=sflag, size = 0x4, scoped, tag = 'scoped memory for tpu_custom_call.1']
    #allocation19 [shape = 'u8[512]{0}', space=vmem, size = 0x400, scoped, tag = 'input window, operand 10, single buffered']
    #allocation20 [shape = 'u8[512]{0}', space=vmem, size = 0x400, scoped, tag = 'input window, operand 11, single buffered']
    #allocation21 [shape = 's32[1]{0}', space=sflag, size = 0x4, scoped, tag = 'scoped memory for tpu_custom_call.1']
    #allocation22 [shape = 'u8[8192]{0}', space=vmem, size = 0x2000, scoped, tag = 'input window, operand 12, single buffered']
    #allocation23 [shape = 'u8[512]{0}', space=vmem, size = 0x400, scoped, tag = 'input window, operand 13, single buffered']
    #allocation24 [shape = 's32[1]{0}', space=sflag, size = 0x4, scoped, tag = 'scoped memory for tpu_custom_call.1']
    #allocation25 [shape = 'u8[16384]{0}', space=vmem, size = 0x4000, scoped, tag = 'input window, operand 14, single buffered']
    #allocation26 [shape = 'u8[512]{0}', space=vmem, size = 0x400, scoped, tag = 'input window, operand 15, single buffered']
    #allocation27 [shape = 's32[1]{0}', space=sflag, size = 0x4, scoped, tag = 'scoped memory for tpu_custom_call.1']
    #allocation28 [shape = 'u8[8192]{0}', space=vmem, size = 0x2000, scoped, tag = 'output window, operand 0, single buffered']
    #allocation29 [shape = 'u8[32768]{0}', space=vmem, size = 0x8000, scoped, tag = 'output window, operand 1, single buffered']
    #allocation30 [shape = 's32[1]{0}', space=sflag, size = 0x4, scoped, tag = 'scoped memory for tpu_custom_call.1']
    %23 = vsyncpa [#allocation3], 0
    %24 = vsyncpa [#allocation6], 0
    %25 = vsyncpa [#allocation9], 0
    %26 = vsyncpa [#allocation12], 0
    %27 = vsyncpa [#allocation15], 0
    %28 = vsyncpa [#allocation18], 0
    %29 = vsyncpa [#allocation21], 0
    %30 = vsyncpa [#allocation24], 0
    %31 = vsyncpa [#allocation27], 0
    %32 = vsyncpa [#allocation4], 0
    %33 = vsyncpa [#allocation30], 0
    // Predicated region
    $region2: #{tpu_custom_call.1} parent=1 // pred_check
      _
    $region3: #{tpu_custom_call.1} parent=1 // pred_check_branch
      %35 = sbr.rel (0) target = $region5
    $region4: #{tpu_custom_call.1} parent=1 // pred_region
      %s37 = ssub.s32 256, 256
      %38 = vsyncadd [#allocation3], %s37
      %s39 = sshll.u32 [#allocation2], 4
      %s40 = int_to_ptr.vmem [resolvable:$true] %s39
      %45 = dma.hbm_to_vmem [thread:$0]  %s0, 256, %s40, [#allocation3], 128, 128, 8
    $region5: #{tpu_custom_call.1} parent=1 // pred_fallthru
      _
    // Predicated region
    $region6: #{tpu_custom_call.1} parent=1 // pred_check
      _
    $region7: #{tpu_custom_call.1} parent=1 // pred_check_branch
      %47 = sbr.rel (0) target = $region9
    $region8: #{tpu_custom_call.1} parent=1 // pred_region
      %s49 = ssub.s32 256, 256
      %50 = vsyncadd [#allocation6], %s49
      %s51 = sshll.u32 [#allocation5], 4
      %s52 = int_to_ptr.vmem [resolvable:$true] %s51
      %57 = dma.hbm_to_vmem [thread:$0]  %s1, 256, %s52, [#allocation6], 128, 128, 8
    $region9: #{tpu_custom_call.1} parent=1 // pred_fallthru
      _
    // Predicated region
    $region10: #{tpu_custom_call.1} parent=1 // pred_check
      _
    $region11: #{tpu_custom_call.1} parent=1 // pred_check_branch
      %59 = sbr.rel (0) target = $region13
    $region12: #{tpu_custom_call.1} parent=1 // pred_region
      %s61 = ssub.s32 256, 256
      %62 = vsyncadd [#allocation6], %s61
      %s63 = sshll.u32 [#allocation7], 4
      %s64 = int_to_ptr.vmem [resolvable:$true] %s63
      %69 = dma.hbm_to_vmem [thread:$0]  %s2, 256, %s64, [#allocation6], 64, 64, 4
    $region13: #{tpu_custom_call.1} parent=1 // pred_fallthru
      _
    // Predicated region
    $region14: #{tpu_custom_call.1} parent=1 // pred_check
      _
    $region15: #{tpu_custom_call.1} parent=1 // pred_check_branch
      %71 = sbr.rel (0) target = $region17
    $region16: #{tpu_custom_call.1} parent=1 // pred_region
      %s73 = ssub.s32 256, 256
      %74 = vsyncadd [#allocation9], %s73
      %s75 = sshll.u32 [#allocation8], 4
      %s76 = int_to_ptr.vmem [resolvable:$true] %s75
      %81 = dma.hbm_to_vmem [thread:$0]  %s3, 256, %s76, [#allocation9], 64, 64, 4
    $region17: #{tpu_custom_call.1} parent=1 // pred_fallthru
      _
    // Predicated region
    $region18: #{tpu_custom_call.1} parent=1 // pred_check
      _
    $region19: #{tpu_custom_call.1} parent=1 // pred_check_branch
      %83 = sbr.rel (0) target = $region21
    $region20: #{tpu_custom_call.1} parent=1 // pred_region
      %s85 = ssub.s32 256, 256
      %86 = vsyncadd [#allocation9], %s85
      %s87 = sshll.u32 [#allocation10], 4
      %s88 = int_to_ptr.vmem [resolvable:$true] %s87
      %93 = dma.hbm_to_vmem [thread:$0]  %s4, 256, %s88, [#allocation9], 64, 64, 4
    $region21: #{tpu_custom_call.1} parent=1 // pred_fallthru
      _
    // Predicated region
    $region22: #{tpu_custom_call.1} parent=1 // pred_check
      _
    $region23: #{tpu_custom_call.1} parent=1 // pred_check_branch
      %95 = sbr.rel (0) target = $region25
    $region24: #{tpu_custom_call.1} parent=1 // pred_region
      %s97 = ssub.s32 256, 256
      %98 = vsyncadd [#allocation12], %s97
      %s99 = sshll.u32 [#allocation11], 4
      %s100 = int_to_ptr.vmem [resolvable:$true] %s99
      %105 = dma.hbm_to_vmem [thread:$0]  %s5, 256, %s100, [#allocation12], 64, 64, 4
    $region25: #{tpu_custom_call.1} parent=1 // pred_fallthru
      _
    // Predicated region
    $region26: #{tpu_custom_call.1} parent=1 // pred_check
      _
    $region27: #{tpu_custom_call.1} parent=1 // pred_check_branch
      %107 = sbr.rel (0) target = $region29
    $region28: #{tpu_custom_call.1} parent=1 // pred_region
      %s109 = ssub.s32 16, 16
      %110 = vsyncadd [#allocation12], %s109
      %s112 = sshll.u32 [#allocation13], 4
      %s113 = int_to_ptr.vmem [resolvable:$true] %s112
      %115 = dma.hbm_to_vmem [thread:$0]  %s6, 16, %s113, [#allocation12]
    $region29: #{tpu_custom_call.1} parent=1 // pred_fallthru
      _
    // Predicated region
    $region30: #{tpu_custom_call.1} parent=1 // pred_check
      _
    $region31: #{tpu_custom_call.1} parent=1 // pred_check_branch
      %117 = sbr.rel (0) target = $region33
    $region32: #{tpu_custom_call.1} parent=1 // pred_region
      %s119 = ssub.s32 16, 16
      %120 = vsyncadd [#allocation15], %s119
      %s122 = sshll.u32 [#allocation14], 4
      %s123 = int_to_ptr.vmem [resolvable:$true] %s122
      %125 = dma.hbm_to_vmem [thread:$0]  %s7, 16, %s123, [#allocation15]
    $region33: #{tpu_custom_call.1} parent=1 // pred_fallthru
      _
    // Predicated region
    $region34: #{tpu_custom_call.1} parent=1 // pred_check
      _
    $region35: #{tpu_custom_call.1} parent=1 // pred_check_branch
      %127 = sbr.rel (0) target = $region37
    $region36: #{tpu_custom_call.1} parent=1 // pred_region
      %s129 = ssub.s32 16, 16
      %130 = vsyncadd [#allocation15], %s129
      %s132 = sshll.u32 [#allocation16], 4
      %s133 = int_to_ptr.vmem [resolvable:$true] %s132
      %135 = dma.hbm_to_vmem [thread:$0]  %s8, 16, %s133, [#allocation15]
    $region37: #{tpu_custom_call.1} parent=1 // pred_fallthru
      _
    // Predicated region
    $region38: #{tpu_custom_call.1} parent=1 // pred_check
      _
    $region39: #{tpu_custom_call.1} parent=1 // pred_check_branch
      %137 = sbr.rel (0) target = $region41
    $region40: #{tpu_custom_call.1} parent=1 // pred_region
      %s139 = ssub.s32 16, 16
      %140 = vsyncadd [#allocation18], %s139
      %s142 = sshll.u32 [#allocation17], 4
      %s143 = int_to_ptr.vmem [resolvable:$true] %s142
      %145 = dma.hbm_to_vmem [thread:$0]  %s9, 16, %s143, [#allocation18]
    $region41: #{tpu_custom_call.1} parent=1 // pred_fallthru
      _
    // Predicated region
    $region42: #{tpu_custom_call.1} parent=1 // pred_check
      _
    $region43: #{tpu_custom_call.1} parent=1 // pred_check_branch
      %147 = sbr.rel (0) target = $region45
    $region44: #{tpu_custom_call.1} parent=1 // pred_region
      %s149 = ssub.s32 16, 16
      %150 = vsyncadd [#allocation18], %s149
      %s152 = sshll.u32 [#allocation19], 4
      %s153 = int_to_ptr.vmem [resolvable:$true] %s152
      %155 = dma.hbm_to_vmem [thread:$0]  %s10, 16, %s153, [#allocation18]
    $region45: #{tpu_custom_call.1} parent=1 // pred_fallthru
      _
    // Predicated region
    $region46: #{tpu_custom_call.1} parent=1 // pred_check
      _
    $region47: #{tpu_custom_call.1} parent=1 // pred_check_branch
      %157 = sbr.rel (0) target = $region49
    $region48: #{tpu_custom_call.1} parent=1 // pred_region
      %s159 = ssub.s32 16, 16
      %160 = vsyncadd [#allocation21], %s159
      %s162 = sshll.u32 [#allocation20], 4
      %s163 = int_to_ptr.vmem [resolvable:$true] %s162
      %165 = dma.hbm_to_vmem [thread:$0]  %s11, 16, %s163, [#allocation21]
    $region49: #{tpu_custom_call.1} parent=1 // pred_fallthru
      _
    // Predicated region
    $region50: #{tpu_custom_call.1} parent=1 // pred_check
      _
    $region51: #{tpu_custom_call.1} parent=1 // pred_check_branch
      %167 = sbr.rel (0) target = $region53
    $region52: #{tpu_custom_call.1} parent=1 // pred_region
      %s169 = ssub.s32 256, 256
      %170 = vsyncadd [#allocation21], %s169
      %s171 = sshll.u32 [#allocation22], 4
      %s172 = int_to_ptr.vmem [resolvable:$true] %s171
      %177 = dma.hbm_to_vmem [thread:$0]  %s12, 256, %s172, [#allocation21], 64, 64, 4
    $region53: #{tpu_custom_call.1} parent=1 // pred_fallthru
      _
    // Predicated region
    $region54: #{tpu_custom_call.1} parent=1 // pred_check
      _
    $region55: #{tpu_custom_call.1} parent=1 // pred_check_branch
      %179 = sbr.rel (0) target = $region57
    $region56: #{tpu_custom_call.1} parent=1 // pred_region
      %s181 = ssub.s32 16, 16
      %182 = vsyncadd [#allocation24], %s181
      %s184 = sshll.u32 [#allocation23], 4
      %s185 = int_to_ptr.vmem [resolvable:$true] %s184
      %187 = dma.hbm_to_vmem [thread:$0]  %s13, 16, %s185, [#allocation24]
    $region57: #{tpu_custom_call.1} parent=1 // pred_fallthru
      _
    // Predicated region
    $region58: #{tpu_custom_call.1} parent=1 // pred_check
      _
    $region59: #{tpu_custom_call.1} parent=1 // pred_check_branch
      %189 = sbr.rel (0) target = $region61
    $region60: #{tpu_custom_call.1} parent=1 // pred_region
      %s191 = ssub.s32 512, 512
      %192 = vsyncadd [#allocation24], %s191
      %s193 = sshll.u32 [#allocation25], 4
      %s194 = int_to_ptr.vmem [resolvable:$true] %s193
      %199 = dma.hbm_to_vmem [thread:$0]  %s14, 512, %s194, [#allocation24], 64, 64, 4
    $region61: #{tpu_custom_call.1} parent=1 // pred_fallthru
      _
    // Predicated region
    $region62: #{tpu_custom_call.1} parent=1 // pred_check
      _
    $region63: #{tpu_custom_call.1} parent=1 // pred_check_branch
      %201 = sbr.rel (0) target = $region65
    $region64: #{tpu_custom_call.1} parent=1 // pred_region
      %s203 = ssub.s32 16, 16
      %204 = vsyncadd [#allocation27], %s203
      %s206 = sshll.u32 [#allocation26], 4
      %s207 = int_to_ptr.vmem [resolvable:$true] %s206
      %209 = dma.hbm_to_vmem [thread:$0]  %s15, 16, %s207, [#allocation27]
    $region65: #{tpu_custom_call.1} parent=1 // pred_fallthru
      _
    // Predicated region
    $region66: #{tpu_custom_call.1} parent=1 // pred_check
      _
    $region67: #{tpu_custom_call.1} parent=1 // pred_check_branch
      %211 = sbr.rel (0) target = $region69
    $region68: #{tpu_custom_call.1} parent=1 // pred_region
      %212 = dma.done [#allocation3], 256
    $region69: #{tpu_custom_call.1} parent=1 // pred_fallthru
      _
    // Predicated region
    $region70: #{tpu_custom_call.1} parent=1 // pred_check
      _
    $region71: #{tpu_custom_call.1} parent=1 // pred_check_branch
      %214 = sbr.rel (0) target = $region73
    $region72: #{tpu_custom_call.1} parent=1 // pred_region
      %215 = dma.done [#allocation6], 256
    $region73: #{tpu_custom_call.1} parent=1 // pred_fallthru
      _
    // Predicated region
    $region74: #{tpu_custom_call.1} parent=1 // pred_check
      _
    $region75: #{tpu_custom_call.1} parent=1 // pred_check_branch
      %217 = sbr.rel (0) target = $region77
    $region76: #{tpu_custom_call.1} parent=1 // pred_region
      %218 = dma.done [#allocation6], 256
    $region77: #{tpu_custom_call.1} parent=1 // pred_fallthru
      _
    // Predicated region
    $region78: #{tpu_custom_call.1} parent=1 // pred_check
      _
    $region79: #{tpu_custom_call.1} parent=1 // pred_check_branch
      %220 = sbr.rel (0) target = $region81
    $region80: #{tpu_custom_call.1} parent=1 // pred_region
      %221 = dma.done [#allocation9], 256
    $region81: #{tpu_custom_call.1} parent=1 // pred_fallthru
      _
    // Predicated region
    $region82: #{tpu_custom_call.1} parent=1 // pred_check
      _
    $region83: #{tpu_custom_call.1} parent=1 // pred_check_branch
      %223 = sbr.rel (0) target = $region85
    $region84: #{tpu_custom_call.1} parent=1 // pred_region
      %224 = dma.done [#allocation9], 256
    $region85: #{tpu_custom_call.1} parent=1 // pred_fallthru
      _
    // Predicated region
    $region86: #{tpu_custom_call.1} parent=1 // pred_check
      _
    $region87: #{tpu_custom_call.1} parent=1 // pred_check_branch
      %226 = sbr.rel (0) target = $region89
    $region88: #{tpu_custom_call.1} parent=1 // pred_region
      %227 = dma.done [#allocation12], 256
    $region89: #{tpu_custom_call.1} parent=1 // pred_fallthru
      _
    // Predicated region
    $region90: #{tpu_custom_call.1} parent=1 // pred_check
      _
    $region91: #{tpu_custom_call.1} parent=1 // pred_check_branch
      %229 = sbr.rel (0) target = $region93
    $region92: #{tpu_custom_call.1} parent=1 // pred_region
      %230 = dma.done [#allocation12], 16
    $region93: #{tpu_custom_call.1} parent=1 // pred_fallthru
      _
    // Predicated region
    $region94: #{tpu_custom_call.1} parent=1 // pred_check
      _
    $region95: #{tpu_custom_call.1} parent=1 // pred_check_branch
      %232 = sbr.rel (0) target = $region97
    $region96: #{tpu_custom_call.1} parent=1 // pred_region
      %233 = dma.done [#allocation15], 16
    $region97: #{tpu_custom_call.1} parent=1 // pred_fallthru
      _
    // Predicated region
    $region98: #{tpu_custom_call.1} parent=1 // pred_check
      _
    $region99: #{tpu_custom_call.1} parent=1 // pred_check_branch
      %235 = sbr.rel (0) target = $region101
    $region100: #{tpu_custom_call.1} parent=1 // pred_region
      %236 = dma.done [#allocation15], 16
    $region101: #{tpu_custom_call.1} parent=1 // pred_fallthru
      _
    // Predicated region
    $region102: #{tpu_custom_call.1} parent=1 // pred_check
      _
    $region103: #{tpu_custom_call.1} parent=1 // pred_check_branch
      %238 = sbr.rel (0) target = $region105
    $region104: #{tpu_custom_call.1} parent=1 // pred_region
      %239 = dma.done [#allocation18], 16
    $region105: #{tpu_custom_call.1} parent=1 // pred_fallthru
      _
    // Predicated region
    $region106: #{tpu_custom_call.1} parent=1 // pred_check
      _
    $region107: #{tpu_custom_call.1} parent=1 // pred_check_branch
      %241 = sbr.rel (0) target = $region109
    $region108: #{tpu_custom_call.1} parent=1 // pred_region
      %242 = dma.done [#allocation18], 16
    $region109: #{tpu_custom_call.1} parent=1 // pred_fallthru
      _
    // Predicated region
    $region110: #{tpu_custom_call.1} parent=1 // pred_check
      _
    $region111: #{tpu_custom_call.1} parent=1 // pred_check_branch
      %244 = sbr.rel (0) target = $region113
    $region112: #{tpu_custom_call.1} parent=1 // pred_region
      %245 = dma.done [#allocation21], 16
    $region113: #{tpu_custom_call.1} parent=1 // pred_fallthru
      _
    // Predicated region
    $region114: #{tpu_custom_call.1} parent=1 // pred_check
      _
    $region115: #{tpu_custom_call.1} parent=1 // pred_check_branch
      %247 = sbr.rel (0) target = $region117
    $region116: #{tpu_custom_call.1} parent=1 // pred_region
      %248 = dma.done [#allocation21], 256
    $region117: #{tpu_custom_call.1} parent=1 // pred_fallthru
      _
    // Predicated region
    $region118: #{tpu_custom_call.1} parent=1 // pred_check
      _
    $region119: #{tpu_custom_call.1} parent=1 // pred_check_branch
      %250 = sbr.rel (0) target = $region121
    $region120: #{tpu_custom_call.1} parent=1 // pred_region
      %251 = dma.done [#allocation24], 16
    $region121: #{tpu_custom_call.1} parent=1 // pred_fallthru
      _
    // Predicated region
    $region122: #{tpu_custom_call.1} parent=1 // pred_check
      _
    $region123: #{tpu_custom_call.1} parent=1 // pred_check_branch
      %253 = sbr.rel (0) target = $region125
    $region124: #{tpu_custom_call.1} parent=1 // pred_region
      %254 = dma.done [#allocation24], 512
    $region125: #{tpu_custom_call.1} parent=1 // pred_fallthru
      _
    // Predicated region
    $region126: #{tpu_custom_call.1} parent=1 // pred_check
      _
    $region127: #{tpu_custom_call.1} parent=1 // pred_check_branch
      %256 = sbr.rel (0) target = $region129
    $region128: #{tpu_custom_call.1} parent=1 // pred_region
      %257 = dma.done [#allocation27], 16
    $region129: #{tpu_custom_call.1} parent=1 // pred_fallthru
      _
    %v259 = vld [vmem:[#allocation2] sm:$0xff]
    %v260 = vld [vmem:[#allocation2 + $0x8] sm:$0xff]
    %v261 = vld [vmem:[#allocation5] sm:$0xff]
    %v262 = vld [vmem:[#allocation5 + $0x8] sm:$0xff]
    %v263 = vpack.c.bf16 %v260, %v259
    %v264 = vpack.c.bf16 %v262, %v261
    %v265 = vld [vmem:[#allocation8] sm:$0xf]
    %v266 = vld [vmem:[#allocation8 + $0x4] sm:$0xf]
    %v267 = vld [vmem:[#allocation8 + $0x8] sm:$0xf]
    %v268 = vld [vmem:[#allocation8 + $0xc] sm:$0xf]
    %v273 = vunpack.c.l.b16 %v265
    %v274 = vunpack.c.l.b16 %v266
    %v275 = vunpack.c.l.b16 %v267
    %v276 = vunpack.c.l.b16 %v268
    %v277 = vpack.c.b16 %v274, %v273
    %v278 = vpack.c.b16 %v276, %v275
    %vm281 = vcmask 261120
    %v283 = vsel %vm281, %v264, 0
    %285 = vmatprep.subr.bf16.mxu0 0
    %286 = vmatpush1.bf16.msra.mxu0 %v277
    %287 = vmatprep.subr.bf16.mxu0 0
    %288 = vmatpush1.bf16.msra.mxu0 %v278
    %289 = vmatprep.subr.bf16.mxu0 0
    %290 = vmatpush1.bf16.msra.mxu0 0
    %291 = vmatprep.subr.bf16.mxu0 0
    %292 = vmatpush1.bf16.msra.mxu0 0
    %293 = vmatprep.subr.bf16.mxu0 0
    %294 = vmatpush1.bf16.msra.mxu0 0
    %295 = vmatprep.subr.bf16.mxu0 0
    %296 = vmatpush1.bf16.msra.mxu0 0
    %297 = vmatprep.subr.bf16.mxu0 0
    %298 = vmatpush1.bf16.msra.mxu0 0
    %299 = vmatprep.subr.bf16.mxu0 0
    %300 = vmatpush1.bf16.msra.mxu0 0
    %301 = vmatprep.subr.bf16.mxu0 0
    %302 = vmatpush1.bf16.msra.mxu0 0
    %303 = vmatprep.subr.bf16.mxu0 0
    %304 = vmatpush1.bf16.msra.mxu0 0
    %305 = vmatprep.subr.bf16.mxu0 0
    %306 = vmatpush1.bf16.msra.mxu0 0
    %307 = vmatprep.subr.bf16.mxu0 0
    %308 = vmatpush1.bf16.msra.mxu0 0
    %309 = vmatprep.subr.bf16.mxu0 0
    %310 = vmatpush1.bf16.msra.mxu0 0
    %311 = vmatprep.subr.bf16.mxu0 0
    %312 = vmatpush1.bf16.msra.mxu0 0
    %313 = vmatprep.subr.bf16.mxu0 0
    %314 = vmatpush1.bf16.msra.mxu0 0
    %315 = vmatprep.subr.bf16.mxu0 0
    %316 = vmatpush1.bf16.msra.mxu0 0
    %317 = vmatprep.mubr.bf16.mxu0 0
    %318 = vmatmul.mubr.bf16.gmra.mrb[0].mxu0 %v283
    %v319 = vpop.f32.mrb[0].mxu0
    %v320 = vadd.f32 0.0, %v319
    %v321 = vpop.f32.mrb[0].mxu0
    %v322 = vpop.f32.mrb[0].mxu0
    %v323 = vadd.f32 0.0, %v322
    %v324 = vpop.f32.mrb[0].mxu0
    %325 = vdwg.mxu0
    %v326 = vld [vmem:[#allocation10] sm:$0xf]
    %v327 = vld [vmem:[#allocation10 + $0x4] sm:$0xf]
    %v328 = vld [vmem:[#allocation10 + $0x8] sm:$0xf]
    %v329 = vld [vmem:[#allocation10 + $0xc] sm:$0xf]
    %v334 = vunpack.c.l.b16 %v326
    %v335 = vunpack.c.l.b16 %v327
    %v336 = vunpack.c.l.b16 %v328
    %v337 = vunpack.c.l.b16 %v329
    %v338 = vpack.c.b16 %v335, %v334
    %v339 = vpack.c.b16 %v337, %v336
    %v343 = vsel %vm281, %v263, 0
    %345 = vmatprep.subr.bf16.mxu0 0
    %346 = vmatpush1.bf16.msra.mxu0 %v338
    %347 = vmatprep.subr.bf16.mxu0 0
    %348 = vmatpush1.bf16.msra.mxu0 %v339
    %349 = vmatprep.subr.bf16.mxu0 0
    %350 = vmatpush1.bf16.msra.mxu0 0
    %351 = vmatprep.subr.bf16.mxu0 0
    %352 = vmatpush1.bf16.msra.mxu0 0
    %353 = vmatprep.subr.bf16.mxu0 0
    %354 = vmatpush1.bf16.msra.mxu0 0
    %355 = vmatprep.subr.bf16.mxu0 0
    %356 = vmatpush1.bf16.msra.mxu0 0
    %357 = vmatprep.subr.bf16.mxu0 0
    %358 = vmatpush1.bf16.msra.mxu0 0
    %359 = vmatprep.subr.bf16.mxu0 0
    %360 = vmatpush1.bf16.msra.mxu0 0
    %361 = vmatprep.subr.bf16.mxu0 0
    %362 = vmatpush1.bf16.msra.mxu0 0
    %363 = vmatprep.subr.bf16.mxu0 0
    %364 = vmatpush1.bf16.msra.mxu0 0
    %365 = vmatprep.subr.bf16.mxu0 0
    %366 = vmatpush1.bf16.msra.mxu0 0
    %367 = vmatprep.subr.bf16.mxu0 0
    %368 = vmatpush1.bf16.msra.mxu0 0
    %369 = vmatprep.subr.bf16.mxu0 0
    %370 = vmatpush1.bf16.msra.mxu0 0
    %371 = vmatprep.subr.bf16.mxu0 0
    %372 = vmatpush1.bf16.msra.mxu0 0
    %373 = vmatprep.subr.bf16.mxu0 0
    %374 = vmatpush1.bf16.msra.mxu0 0
    %375 = vmatprep.subr.bf16.mxu0 0
    %376 = vmatpush1.bf16.msra.mxu0 0
    %377 = vmatprep.mubr.bf16.mxu0 0
    %378 = vmatmul.mubr.bf16.gmra.mrb[0].mxu0 %v343
    %v379 = vpop.f32.mrb[0].mxu0
    %v380 = vadd.f32 0.0, %v379
    %v381 = vpop.f32.mrb[0].mxu0
    %v382 = vpop.f32.mrb[0].mxu0
    %v383 = vadd.f32 0.0, %v382
    %v384 = vpop.f32.mrb[0].mxu0
    %385 = vdwg.mxu0
    %v386 = vld [vmem:[#allocation7] sm:$0xf]
    %v387 = vld [vmem:[#allocation7 + $0x4] sm:$0xf]
    %v388 = vld [vmem:[#allocation7 + $0x8] sm:$0xf]
    %v389 = vld [vmem:[#allocation7 + $0xc] sm:$0xf]
    %v390 = vunpack.c.l.bf16 %v386
    %v391 = vunpack.c.l.bf16 %v387
    %v392 = vunpack.c.l.bf16 %v388
    %v393 = vunpack.c.l.bf16 %v389
    %v394 = vpack.c.bf16 %v320, %v320
    %v395 = vpack.c.bf16 %v380, %v380
    %397 = vrot.lane.b32.xlu0 %v394, 96
    %v398 = vpop.permute.xlu0 %397
    %vm399 = vcmask 64512
    %v401 = vsel %vm399, %v394, 0
    %v404 = vsel %vm399, %v398, 0
    %406 = vmatprep.subr.bf16.mxu0 0
    %407 = vmatpush1.bf16.xpose.msra.mxu0 %v404
    %408 = vmatprep.subr.bf16.mxu0 0
    %409 = vmatpush1.bf16.xpose.msra.mxu0 0
    %410 = vmatprep.subr.bf16.mxu0 0
    %411 = vmatpush1.bf16.xpose.msra.mxu0 0
    %412 = vmatprep.subr.bf16.mxu0 0
    %413 = vmatpush1.bf16.xpose.msra.mxu0 0
    %414 = vmatprep.subr.bf16.mxu0 0
    %415 = vmatpush1.bf16.xpose.msra.mxu0 0
    %416 = vmatprep.subr.bf16.mxu0 0
    %417 = vmatpush1.bf16.xpose.msra.mxu0 0
    %418 = vmatprep.subr.bf16.mxu0 0
    %419 = vmatpush1.bf16.xpose.msra.mxu0 0
    %420 = vmatprep.subr.bf16.mxu0 0
    %421 = vmatpush1.bf16.xpose.msra.mxu0 0
    %422 = vmatprep.subr.bf16.mxu0 0
    %423 = vmatpush1.bf16.xpose.msra.mxu0 0
    %424 = vmatprep.subr.bf16.mxu0 0
    %425 = vmatpush1.bf16.xpose.msra.mxu0 0
    %426 = vmatprep.subr.bf16.mxu0 0
    %427 = vmatpush1.bf16.xpose.msra.mxu0 0
    %428 = vmatprep.subr.bf16.mxu0 0
    %429 = vmatpush1.bf16.xpose.msra.mxu0 0
    %430 = vmatprep.subr.bf16.mxu0 0
    %431 = vmatpush1.bf16.xpose.msra.mxu0 0
    %432 = vmatprep.subr.bf16.mxu0 0
    %433 = vmatpush1.bf16.xpose.msra.mxu0 0
    %434 = vmatprep.subr.bf16.mxu0 0
    %435 = vmatpush1.bf16.xpose.msra.mxu0 0
    %436 = vmatprep.subr.bf16.mxu0 0
    %437 = vmatpush1.bf16.xpose.msra.mxu0 0
    %438 = vmatprep.mubr.bf16.mxu0 0
    %439 = vmatmul.mubr.bf16.gmra.mrb[0].mxu0 %v401
    %v440 = vpop.f32.mrb[0].mxu0
    %v441 = vadd.f32 0.0, %v440
    %v442 = vpop.f32.mrb[0].mxu0
    %v443 = vpop.f32.mrb[0].mxu0
    %v444 = vpop.f32.mrb[0].mxu0
    %445 = vdwg.mxu0
    %v446 = vsel %vm399, %v441, -inf
    %447 = vmax.xlane.f32.xlu0 %v446
    %v448 = vpop.xlane.xlu0 %447
    %v449 = vsub.f32 %v441, %v448
    %v450 = vmul.f32 %v449, 1.442695
    %v451 = vpow.pop %v450
    %v452 = vsel %vm399, %v451, 0.0
    %453 = vadd.xlane.f32.xlu0 %v452
    %v454 = vpop.xlane.xlu0 %453
    %v455 = vrcp.pop %v454
    %v456 = vmul.f32 %v451, %v455
    %457 = vst.msk [vmem:[#allocation29] sm:$0xff] %vm399, %v456
    %v458 = vmul.f32 %v456, %v390
    %v459 = vpack.c.bf16 %v458, %v458
    %v461 = vsel %vm399, %v459, 0
    %vm463 = vcmask 1043456
    %v465 = vsel %vm463, %v395, 0
    %467 = vmatprep.subr.bf16.mxu0 0
    %468 = vmatpush1.bf16.msra.mxu0 %v465
    %469 = vmatprep.subr.bf16.mxu0 0
    %470 = vmatpush1.bf16.msra.mxu0 0
    %471 = vmatprep.subr.bf16.mxu0 0
    %472 = vmatpush1.bf16.msra.mxu0 0
    %473 = vmatprep.subr.bf16.mxu0 0
    %474 = vmatpush1.bf16.msra.mxu0 0
    %475 = vmatprep.subr.bf16.mxu0 0
    %476 = vmatpush1.bf16.msra.mxu0 0
    %477 = vmatprep.subr.bf16.mxu0 0
    %478 = vmatpush1.bf16.msra.mxu0 0
    %479 = vmatprep.subr.bf16.mxu0 0
    %480 = vmatpush1.bf16.msra.mxu0 0
    %481 = vmatprep.subr.bf16.mxu0 0
    %482 = vmatpush1.bf16.msra.mxu0 0
    %483 = vmatprep.subr.bf16.mxu0 0
    %484 = vmatpush1.bf16.msra.mxu0 0
    %485 = vmatprep.subr.bf16.mxu0 0
    %486 = vmatpush1.bf16.msra.mxu0 0
    %487 = vmatprep.subr.bf16.mxu0 0
    %488 = vmatpush1.bf16.msra.mxu0 0
    %489 = vmatprep.subr.bf16.mxu0 0
    %490 = vmatpush1.bf16.msra.mxu0 0
    %491 = vmatprep.subr.bf16.mxu0 0
    %492 = vmatpush1.bf16.msra.mxu0 0
    %493 = vmatprep.subr.bf16.mxu0 0
    %494 = vmatpush1.bf16.msra.mxu0 0
    %495 = vmatprep.subr.bf16.mxu0 0
    %496 = vmatpush1.bf16.msra.mxu0 0
    %497 = vmatprep.subr.bf16.mxu0 0
    %498 = vmatpush1.bf16.msra.mxu0 0
    %499 = vmatprep.mubr.bf16.mxu0 0
    %500 = vmatmul.mubr.bf16.gmra.mrb[0].mxu0 %v461
    %v501 = vpop.f32.mrb[0].mxu0
    %v502 = vadd.f32 0.0, %v501
    %v503 = vpop.f32.mrb[0].mxu0
    %v504 = vpop.f32.mrb[0].mxu0
    %v505 = vpop.f32.mrb[0].mxu0
    %506 = vdwg.mxu0
    %507 = vrot.lane.b32.xlu0 %v394, 120
    %v508 = vpop.permute.xlu0 %507
    %509 = vrot.lane.b32.xlu0 %v394, 88
    %v510 = vpop.permute.xlu0 %509
    %v512 = vsel %vm399, %v508, 0
    %v515 = vsel %vm399, %v510, 0
    %517 = vmatprep.subr.bf16.mxu0 0
    %518 = vmatpush1.bf16.xpose.msra.mxu0 %v515
    %519 = vmatprep.subr.bf16.mxu0 0
    %520 = vmatpush1.bf16.xpose.msra.mxu0 0
    %521 = vmatprep.subr.bf16.mxu0 0
    %522 = vmatpush1.bf16.xpose.msra.mxu0 0
    %523 = vmatprep.subr.bf16.mxu0 0
    %524 = vmatpush1.bf16.xpose.msra.mxu0 0
    %525 = vmatprep.subr.bf16.mxu0 0
    %526 = vmatpush1.bf16.xpose.msra.mxu0 0
    %527 = vmatprep.subr.bf16.mxu0 0
    %528 = vmatpush1.bf16.xpose.msra.mxu0 0
    %529 = vmatprep.subr.bf16.mxu0 0
    %530 = vmatpush1.bf16.xpose.msra.mxu0 0
    %531 = vmatprep.subr.bf16.mxu0 0
    %532 = vmatpush1.bf16.xpose.msra.mxu0 0
    %533 = vmatprep.subr.bf16.mxu0 0
    %534 = vmatpush1.bf16.xpose.msra.mxu0 0
    %535 = vmatprep.subr.bf16.mxu0 0
    %536 = vmatpush1.bf16.xpose.msra.mxu0 0
    %537 = vmatprep.subr.bf16.mxu0 0
    %538 = vmatpush1.bf16.xpose.msra.mxu0 0
    %539 = vmatprep.subr.bf16.mxu0 0
    %540 = vmatpush1.bf16.xpose.msra.mxu0 0
    %541 = vmatprep.subr.bf16.mxu0 0
    %542 = vmatpush1.bf16.xpose.msra.mxu0 0
    %543 = vmatprep.subr.bf16.mxu0 0
    %544 = vmatpush1.bf16.xpose.msra.mxu0 0
    %545 = vmatprep.subr.bf16.mxu0 0
    %546 = vmatpush1.bf16.xpose.msra.mxu0 0
    %547 = vmatprep.subr.bf16.mxu0 0
    %548 = vmatpush1.bf16.xpose.msra.mxu0 0
    %549 = vmatprep.mubr.bf16.mxu0 0
    %550 = vmatmul.mubr.bf16.gmra.mrb[0].mxu0 %v512
    %v551 = vpop.f32.mrb[0].mxu0
    %v552 = vadd.f32 0.0, %v551
    %v553 = vpop.f32.mrb[0].mxu0
    %v554 = vpop.f32.mrb[0].mxu0
    %v555 = vpop.f32.mrb[0].mxu0
    %556 = vdwg.mxu0
    %v557 = vsel %vm399, %v552, -inf
    %558 = vmax.xlane.f32.xlu0 %v557
    %v559 = vpop.xlane.xlu0 %558
    %v560 = vsub.f32 %v552, %v559
    %v561 = vmul.f32 %v560, 1.442695
    %v562 = vpow.pop %v561
    %v563 = vsel %vm399, %v562, 0.0
    %564 = vadd.xlane.f32.xlu0 %v563
    %v565 = vpop.xlane.xlu0 %564
    %v566 = vrcp.pop %v565
    %v567 = vmul.f32 %v562, %v566
    %s568 = scalar_lea.vmem [#allocation29], 8
    %569 = vst.msk [vmem:[%s568] sm:$0xff] %vm399, %v567
    %v570 = vmul.f32 %v567, %v391
    %v571 = vpack.c.bf16 %v570, %v570
    %573 = vrot.lane.b32.xlu0 %v395, 120
    %v574 = vpop.permute.xlu0 %573
    %v576 = vsel %vm399, %v571, 0
    %v579 = vsel %vm463, %v574, 0
    %581 = vmatprep.subr.bf16.mxu0 0
    %582 = vmatpush1.bf16.msra.mxu0 %v579
    %583 = vmatprep.subr.bf16.mxu0 0
    %584 = vmatpush1.bf16.msra.mxu0 0
    %585 = vmatprep.subr.bf16.mxu0 0
    %586 = vmatpush1.bf16.msra.mxu0 0
    %587 = vmatprep.subr.bf16.mxu0 0
    %588 = vmatpush1.bf16.msra.mxu0 0
    %589 = vmatprep.subr.bf16.mxu0 0
    %590 = vmatpush1.bf16.msra.mxu0 0
    %591 = vmatprep.subr.bf16.mxu0 0
    %592 = vmatpush1.bf16.msra.mxu0 0
    %593 = vmatprep.subr.bf16.mxu0 0
    %594 = vmatpush1.bf16.msra.mxu0 0
    %595 = vmatprep.subr.bf16.mxu0 0
    %596 = vmatpush1.bf16.msra.mxu0 0
    %597 = vmatprep.subr.bf16.mxu0 0
    %598 = vmatpush1.bf16.msra.mxu0 0
    %599 = vmatprep.subr.bf16.mxu0 0
    %600 = vmatpush1.bf16.msra.mxu0 0
    %601 = vmatprep.subr.bf16.mxu0 0
    %602 = vmatpush1.bf16.msra.mxu0 0
    %603 = vmatprep.subr.bf16.mxu0 0
    %604 = vmatpush1.bf16.msra.mxu0 0
    %605 = vmatprep.subr.bf16.mxu0 0
    %606 = vmatpush1.bf16.msra.mxu0 0
    %607 = vmatprep.subr.bf16.mxu0 0
    %608 = vmatpush1.bf16.msra.mxu0 0
    %609 = vmatprep.subr.bf16.mxu0 0
    %610 = vmatpush1.bf16.msra.mxu0 0
    %611 = vmatprep.subr.bf16.mxu0 0
    %612 = vmatpush1.bf16.msra.mxu0 0
    %613 = vmatprep.mubr.bf16.mxu0 0
    %614 = vmatmul.mubr.bf16.gmra.mrb[0].mxu0 %v576
    %v615 = vpop.f32.mrb[0].mxu0
    %v616 = vadd.f32 0.0, %v615
    %v617 = vpop.f32.mrb[0].mxu0
    %v618 = vpop.f32.mrb[0].mxu0
    %v619 = vpop.f32.mrb[0].mxu0
    %620 = vdwg.mxu0
    %621 = vrot.lane.b32.xlu0 %v394, 112
    %v622 = vpop.permute.xlu0 %621
    %623 = vrot.lane.b32.xlu0 %v394, 80
    %v624 = vpop.permute.xlu0 %623
    %v626 = vsel %vm399, %v622, 0
    %v629 = vsel %vm399, %v624, 0
    %631 = vmatprep.subr.bf16.mxu0 0
    %632 = vmatpush1.bf16.xpose.msra.mxu0 %v629
    %633 = vmatprep.subr.bf16.mxu0 0
    %634 = vmatpush1.bf16.xpose.msra.mxu0 0
    %635 = vmatprep.subr.bf16.mxu0 0
    %636 = vmatpush1.bf16.xpose.msra.mxu0 0
    %637 = vmatprep.subr.bf16.mxu0 0
    %638 = vmatpush1.bf16.xpose.msra.mxu0 0
    %639 = vmatprep.subr.bf16.mxu0 0
    %640 = vmatpush1.bf16.xpose.msra.mxu0 0
    %641 = vmatprep.subr.bf16.mxu0 0
    %642 = vmatpush1.bf16.xpose.msra.mxu0 0
    %643 = vmatprep.subr.bf16.mxu0 0
    %644 = vmatpush1.bf16.xpose.msra.mxu0 0
    %645 = vmatprep.subr.bf16.mxu0 0
    %646 = vmatpush1.bf16.xpose.msra.mxu0 0
    %647 = vmatprep.subr.bf16.mxu0 0
    %648 = vmatpush1.bf16.xpose.msra.mxu0 0
    %649 = vmatprep.subr.bf16.mxu0 0
    %650 = vmatpush1.bf16.xpose.msra.mxu0 0
    %651 = vmatprep.subr.bf16.mxu0 0
    %652 = vmatpush1.bf16.xpose.msra.mxu0 0
    %653 = vmatprep.subr.bf16.mxu0 0
    %654 = vmatpush1.bf16.xpose.msra.mxu0 0
    %655 = vmatprep.subr.bf16.mxu0 0
    %656 = vmatpush1.bf16.xpose.msra.mxu0 0
    %657 = vmatprep.subr.bf16.mxu0 0
    %658 = vmatpush1.bf16.xpose.msra.mxu0 0
    %659 = vmatprep.subr.bf16.mxu0 0
    %660 = vmatpush1.bf16.xpose.msra.mxu0 0
    %661 = vmatprep.subr.bf16.mxu0 0
    %662 = vmatpush1.bf16.xpose.msra.mxu0 0
    %663 = vmatprep.mubr.bf16.mxu0 0
    %664 = vmatmul.mubr.bf16.gmra.mrb[0].mxu0 %v626
    %v665 = vpop.f32.mrb[0].mxu0
    %v666 = vadd.f32 0.0, %v665
    %v667 = vpop.f32.mrb[0].mxu0
    %v668 = vpop.f32.mrb[0].mxu0
    %v669 = vpop.f32.mrb[0].mxu0
    %670 = vdwg.mxu0
    %v671 = vsel %vm399, %v666, -inf
    %672 = vmax.xlane.f32.xlu0 %v671
    %v673 = vpop.xlane.xlu0 %672
    %v674 = vsub.f32 %v666, %v673
    %v675 = vmul.f32 %v674, 1.442695
    %v676 = vpow.pop %v675
    %v677 = vsel %vm399, %v676, 0.0
    %678 = vadd.xlane.f32.xlu0 %v677
    %v679 = vpop.xlane.xlu0 %678
    %v680 = vrcp.pop %v679
    %v681 = vmul.f32 %v676, %v680
    %s682 = scalar_lea.vmem [#allocation29], 16
    %683 = vst.msk [vmem:[%s682] sm:$0xff] %vm399, %v681
    %v684 = vmul.f32 %v681, %v392
    %v685 = vpack.c.bf16 %v684, %v684
    %686 = vrot.lane.b32.xlu0 %v395, 112
    %v687 = vpop.permute.xlu0 %686
    %v689 = vsel %vm399, %v685, 0
    %v692 = vsel %vm463, %v687, 0
    %694 = vmatprep.subr.bf16.mxu0 0
    %695 = vmatpush1.bf16.msra.mxu0 %v692
    %696 = vmatprep.subr.bf16.mxu0 0
    %697 = vmatpush1.bf16.msra.mxu0 0
    %698 = vmatprep.subr.bf16.mxu0 0
    %699 = vmatpush1.bf16.msra.mxu0 0
    %700 = vmatprep.subr.bf16.mxu0 0
    %701 = vmatpush1.bf16.msra.mxu0 0
    %702 = vmatprep.subr.bf16.mxu0 0
    %703 = vmatpush1.bf16.msra.mxu0 0
    %704 = vmatprep.subr.bf16.mxu0 0
    %705 = vmatpush1.bf16.msra.mxu0 0
    %706 = vmatprep.subr.bf16.mxu0 0
    %707 = vmatpush1.bf16.msra.mxu0 0
    %708 = vmatprep.subr.bf16.mxu0 0
    %709 = vmatpush1.bf16.msra.mxu0 0
    %710 = vmatprep.subr.bf16.mxu0 0
    %711 = vmatpush1.bf16.msra.mxu0 0
    %712 = vmatprep.subr.bf16.mxu0 0
    %713 = vmatpush1.bf16.msra.mxu0 0
    %714 = vmatprep.subr.bf16.mxu0 0
    %715 = vmatpush1.bf16.msra.mxu0 0
    %716 = vmatprep.subr.bf16.mxu0 0
    %717 = vmatpush1.bf16.msra.mxu0 0
    %718 = vmatprep.subr.bf16.mxu0 0
    %719 = vmatpush1.bf16.msra.mxu0 0
    %720 = vmatprep.subr.bf16.mxu0 0
    %721 = vmatpush1.bf16.msra.mxu0 0
    %722 = vmatprep.subr.bf16.mxu0 0
    %723 = vmatpush1.bf16.msra.mxu0 0
    %724 = vmatprep.subr.bf16.mxu0 0
    %725 = vmatpush1.bf16.msra.mxu0 0
    %726 = vmatprep.mubr.bf16.mxu0 0
    %727 = vmatmul.mubr.bf16.gmra.mrb[0].mxu0 %v689
    %v728 = vpop.f32.mrb[0].mxu0
    %v729 = vadd.f32 0.0, %v728
    %v730 = vpop.f32.mrb[0].mxu0
    %v731 = vpop.f32.mrb[0].mxu0
    %v732 = vpop.f32.mrb[0].mxu0
    %733 = vdwg.mxu0
    %734 = vrot.lane.b32.xlu0 %v394, 104
    %v735 = vpop.permute.xlu0 %734
    %736 = vrot.lane.b32.xlu0 %v394, 72
    %v737 = vpop.permute.xlu0 %736
    %v739 = vsel %vm399, %v735, 0
    %v742 = vsel %vm399, %v737, 0
    %744 = vmatprep.subr.bf16.mxu0 0
    %745 = vmatpush1.bf16.xpose.msra.mxu0 %v742
    %746 = vmatprep.subr.bf16.mxu0 0
    %747 = vmatpush1.bf16.xpose.msra.mxu0 0
    %748 = vmatprep.subr.bf16.mxu0 0
    %749 = vmatpush1.bf16.xpose.msra.mxu0 0
    %750 = vmatprep.subr.bf16.mxu0 0
    %751 = vmatpush1.bf16.xpose.msra.mxu0 0
    %752 = vmatprep.subr.bf16.mxu0 0
    %753 = vmatpush1.bf16.xpose.msra.mxu0 0
    %754 = vmatprep.subr.bf16.mxu0 0
    %755 = vmatpush1.bf16.xpose.msra.mxu0 0
    %756 = vmatprep.subr.bf16.mxu0 0
    %757 = vmatpush1.bf16.xpose.msra.mxu0 0
    %758 = vmatprep.subr.bf16.mxu0 0
    %759 = vmatpush1.bf16.xpose.msra.mxu0 0
    %760 = vmatprep.subr.bf16.mxu0 0
    %761 = vmatpush1.bf16.xpose.msra.mxu0 0
    %762 = vmatprep.subr.bf16.mxu0 0
    %763 = vmatpush1.bf16.xpose.msra.mxu0 0
    %764 = vmatprep.subr.bf16.mxu0 0
    %765 = vmatpush1.bf16.xpose.msra.mxu0 0
    %766 = vmatprep.subr.bf16.mxu0 0
    %767 = vmatpush1.bf16.xpose.msra.mxu0 0
    %768 = vmatprep.subr.bf16.mxu0 0
    %769 = vmatpush1.bf16.xpose.msra.mxu0 0
    %770 = vmatprep.subr.bf16.mxu0 0
    %771 = vmatpush1.bf16.xpose.msra.mxu0 0
    %772 = vmatprep.subr.bf16.mxu0 0
    %773 = vmatpush1.bf16.xpose.msra.mxu0 0
    %774 = vmatprep.subr.bf16.mxu0 0
    %775 = vmatpush1.bf16.xpose.msra.mxu0 0
    %776 = vmatprep.mubr.bf16.mxu0 0
    %777 = vmatmul.mubr.bf16.gmra.mrb[0].mxu0 %v739
    %v778 = vpop.f32.mrb[0].mxu0
    %v779 = vadd.f32 0.0, %v778
    %v780 = vpop.f32.mrb[0].mxu0
    %v781 = vpop.f32.mrb[0].mxu0
    %v782 = vpop.f32.mrb[0].mxu0
    %783 = vdwg.mxu0
    %v784 = vsel %vm399, %v779, -inf
    %785 = vmax.xlane.f32.xlu0 %v784
    %v786 = vpop.xlane.xlu0 %785
    %v787 = vsub.f32 %v779, %v786
    %v788 = vmul.f32 %v787, 1.442695
    %v789 = vpow.pop %v788
    %v790 = vsel %vm399, %v789, 0.0
    %791 = vadd.xlane.f32.xlu0 %v790
    %v792 = vpop.xlane.xlu0 %791
    %v793 = vrcp.pop %v792
    %v794 = vmul.f32 %v789, %v793
    %s795 = scalar_lea.vmem [#allocation29], 24
    %796 = vst.msk [vmem:[%s795] sm:$0xff] %vm399, %v794
    %v797 = vmul.f32 %v794, %v393
    %v798 = vpack.c.bf16 %v797, %v797
    %799 = vrot.lane.b32.xlu0 %v395, 104
    %v800 = vpop.permute.xlu0 %799
    %v802 = vsel %vm399, %v798, 0
    %v805 = vsel %vm463, %v800, 0
    %807 = vmatprep.subr.bf16.mxu0 0
    %808 = vmatpush1.bf16.msra.mxu0 %v805
    %809 = vmatprep.subr.bf16.mxu0 0
    %810 = vmatpush1.bf16.msra.mxu0 0
    %811 = vmatprep.subr.bf16.mxu0 0
    %812 = vmatpush1.bf16.msra.mxu0 0
    %813 = vmatprep.subr.bf16.mxu0 0
    %814 = vmatpush1.bf16.msra.mxu0 0
    %815 = vmatprep.subr.bf16.mxu0 0
    %816 = vmatpush1.bf16.msra.mxu0 0
    %817 = vmatprep.subr.bf16.mxu0 0
    %818 = vmatpush1.bf16.msra.mxu0 0
    %819 = vmatprep.subr.bf16.mxu0 0
    %820 = vmatpush1.bf16.msra.mxu0 0
    %821 = vmatprep.subr.bf16.mxu0 0
    %822 = vmatpush1.bf16.msra.mxu0 0
    %823 = vmatprep.subr.bf16.mxu0 0
    %824 = vmatpush1.bf16.msra.mxu0 0
    %825 = vmatprep.subr.bf16.mxu0 0
    %826 = vmatpush1.bf16.msra.mxu0 0
    %827 = vmatprep.subr.bf16.mxu0 0
    %828 = vmatpush1.bf16.msra.mxu0 0
    %829 = vmatprep.subr.bf16.mxu0 0
    %830 = vmatpush1.bf16.msra.mxu0 0
    %831 = vmatprep.subr.bf16.mxu0 0
    %832 = vmatpush1.bf16.msra.mxu0 0
    %833 = vmatprep.subr.bf16.mxu0 0
    %834 = vmatpush1.bf16.msra.mxu0 0
    %835 = vmatprep.subr.bf16.mxu0 0
    %836 = vmatpush1.bf16.msra.mxu0 0
    %837 = vmatprep.subr.bf16.mxu0 0
    %838 = vmatpush1.bf16.msra.mxu0 0
    %839 = vmatprep.mubr.bf16.mxu0 0
    %840 = vmatmul.mubr.bf16.gmra.mrb[0].mxu0 %v802
    %v841 = vpop.f32.mrb[0].mxu0
    %v842 = vadd.f32 0.0, %v841
    %v843 = vpop.f32.mrb[0].mxu0
    %v844 = vpop.f32.mrb[0].mxu0
    %v845 = vpop.f32.mrb[0].mxu0
    %846 = vdwg.mxu0
    %848 = vrot.lane.b32.xlu0 %v616, 8
    %v849 = vpop.permute.xlu0 %848
    %852 = vrot.lane.b32.xlu0 %v729, 16
    %v853 = vpop.permute.xlu0 %852
    %856 = vrot.lane.b32.xlu0 %v842, 24
    %v857 = vpop.permute.xlu0 %856
    %v859 = vsel %vm399, %v502, %v849
    %vm860 = vcmask 130048
    %v861 = vsel %vm860, %v859, %v853
    %vm862 = vcmask 195584
    %v863 = vsel %vm862, %v861, %v857
    %v864 = vpack.c.bf16 %v323, %v323
    %v865 = vpack.c.bf16 %v383, %v383
    %867 = vrot.lane.b32.xlu0 %v864, 96
    %v868 = vpop.permute.xlu0 %867
    %v870 = vsel %vm399, %v864, 0
    %v873 = vsel %vm399, %v868, 0
    %875 = vmatprep.subr.bf16.mxu0 0
    %876 = vmatpush1.bf16.xpose.msra.mxu0 %v873
    %877 = vmatprep.subr.bf16.mxu0 0
    %878 = vmatpush1.bf16.xpose.msra.mxu0 0
    %879 = vmatprep.subr.bf16.mxu0 0
    %880 = vmatpush1.bf16.xpose.msra.mxu0 0
    %881 = vmatprep.subr.bf16.mxu0 0
    %882 = vmatpush1.bf16.xpose.msra.mxu0 0
    %883 = vmatprep.subr.bf16.mxu0 0
    %884 = vmatpush1.bf16.xpose.msra.mxu0 0
    %885 = vmatprep.subr.bf16.mxu0 0
    %886 = vmatpush1.bf16.xpose.msra.mxu0 0
    %887 = vmatprep.subr.bf16.mxu0 0
    %888 = vmatpush1.bf16.xpose.msra.mxu0 0
    %889 = vmatprep.subr.bf16.mxu0 0
    %890 = vmatpush1.bf16.xpose.msra.mxu0 0
    %891 = vmatprep.subr.bf16.mxu0 0
    %892 = vmatpush1.bf16.xpose.msra.mxu0 0
    %893 = vmatprep.subr.bf16.mxu0 0
    %894 = vmatpush1.bf16.xpose.msra.mxu0 0
    %895 = vmatprep.subr.bf16.mxu0 0
    %896 = vmatpush1.bf16.xpose.msra.mxu0 0
    %897 = vmatprep.subr.bf16.mxu0 0
    %898 = vmatpush1.bf16.xpose.msra.mxu0 0
    %899 = vmatprep.subr.bf16.mxu0 0
    %900 = vmatpush1.bf16.xpose.msra.mxu0 0
    %901 = vmatprep.subr.bf16.mxu0 0
    %902 = vmatpush1.bf16.xpose.msra.mxu0 0
    %903 = vmatprep.subr.bf16.mxu0 0
    %904 = vmatpush1.bf16.xpose.msra.mxu0 0
    %905 = vmatprep.subr.bf16.mxu0 0
    %906 = vmatpush1.bf16.xpose.msra.mxu0 0
    %907 = vmatprep.mubr.bf16.mxu0 0
    %908 = vmatmul.mubr.bf16.gmra.mrb[0].mxu0 %v870
    %v909 = vpop.f32.mrb[0].mxu0
    %v910 = vadd.f32 0.0, %v909
    %v911 = vpop.f32.mrb[0].mxu0
    %v912 = vpop.f32.mrb[0].mxu0
    %v913 = vpop.f32.mrb[0].mxu0
    %914 = vdwg.mxu0
    %v915 = vsel %vm399, %v910, -inf
    %916 = vmax.xlane.f32.xlu0 %v915
    %v917 = vpop.xlane.xlu0 %916
    %v918 = vsub.f32 %v910, %v917
    %v919 = vmul.f32 %v918, 1.442695
    %v920 = vpow.pop %v919
    %v921 = vsel %vm399, %v920, 0.0
    %922 = vadd.xlane.f32.xlu0 %v921
    %v923 = vpop.xlane.xlu0 %922
    %v924 = vrcp.pop %v923
    %v925 = vmul.f32 %v920, %v924
    %s926 = scalar_lea.vmem [#allocation29], 32
    %927 = vst.msk [vmem:[%s926] sm:$0xff] %vm399, %v925
    %v928 = vmul.f32 %v925, %v390
    %v929 = vpack.c.bf16 %v928, %v928
    %v931 = vsel %vm399, %v929, 0
    %v934 = vsel %vm463, %v865, 0
    %936 = vmatprep.subr.bf16.mxu0 0
    %937 = vmatpush1.bf16.msra.mxu0 %v934
    %938 = vmatprep.subr.bf16.mxu0 0
    %939 = vmatpush1.bf16.msra.mxu0 0
    %940 = vmatprep.subr.bf16.mxu0 0
    %941 = vmatpush1.bf16.msra.mxu0 0
    %942 = vmatprep.subr.bf16.mxu0 0
    %943 = vmatpush1.bf16.msra.mxu0 0
    %944 = vmatprep.subr.bf16.mxu0 0
    %945 = vmatpush1.bf16.msra.mxu0 0
    %946 = vmatprep.subr.bf16.mxu0 0
    %947 = vmatpush1.bf16.msra.mxu0 0
    %948 = vmatprep.subr.bf16.mxu0 0
    %949 = vmatpush1.bf16.msra.mxu0 0
    %950 = vmatprep.subr.bf16.mxu0 0
    %951 = vmatpush1.bf16.msra.mxu0 0
    %952 = vmatprep.subr.bf16.mxu0 0
    %953 = vmatpush1.bf16.msra.mxu0 0
    %954 = vmatprep.subr.bf16.mxu0 0
    %955 = vmatpush1.bf16.msra.mxu0 0
    %956 = vmatprep.subr.bf16.mxu0 0
    %957 = vmatpush1.bf16.msra.mxu0 0
    %958 = vmatprep.subr.bf16.mxu0 0
    %959 = vmatpush1.bf16.msra.mxu0 0
    %960 = vmatprep.subr.bf16.mxu0 0
    %961 = vmatpush1.bf16.msra.mxu0 0
    %962 = vmatprep.subr.bf16.mxu0 0
    %963 = vmatpush1.bf16.msra.mxu0 0
    %964 = vmatprep.subr.bf16.mxu0 0
    %965 = vmatpush1.bf16.msra.mxu0 0
    %966 = vmatprep.subr.bf16.mxu0 0
    %967 = vmatpush1.bf16.msra.mxu0 0
    %968 = vmatprep.mubr.bf16.mxu0 0
    %969 = vmatmul.mubr.bf16.gmra.mrb[0].mxu0 %v931
    %v970 = vpop.f32.mrb[0].mxu0
    %v971 = vadd.f32 0.0, %v970
    %v972 = vpop.f32.mrb[0].mxu0
    %v973 = vpop.f32.mrb[0].mxu0
    %v974 = vpop.f32.mrb[0].mxu0
    %975 = vdwg.mxu0
    %976 = vrot.lane.b32.xlu0 %v864, 120
    %v977 = vpop.permute.xlu0 %976
    %978 = vrot.lane.b32.xlu0 %v864, 88
    %v979 = vpop.permute.xlu0 %978
    %v981 = vsel %vm399, %v977, 0
    %v984 = vsel %vm399, %v979, 0
    %986 = vmatprep.subr.bf16.mxu0 0
    %987 = vmatpush1.bf16.xpose.msra.mxu0 %v984
    %988 = vmatprep.subr.bf16.mxu0 0
    %989 = vmatpush1.bf16.xpose.msra.mxu0 0
    %990 = vmatprep.subr.bf16.mxu0 0
    %991 = vmatpush1.bf16.xpose.msra.mxu0 0
    %992 = vmatprep.subr.bf16.mxu0 0
    %993 = vmatpush1.bf16.xpose.msra.mxu0 0
    %994 = vmatprep.subr.bf16.mxu0 0
    %995 = vmatpush1.bf16.xpose.msra.mxu0 0
    %996 = vmatprep.subr.bf16.mxu0 0
    %997 = vmatpush1.bf16.xpose.msra.mxu0 0
    %998 = vmatprep.subr.bf16.mxu0 0
    %999 = vmatpush1.bf16.xpose.msra.mxu0 0
    %1000 = vmatprep.subr.bf16.mxu0 0
    %1001 = vmatpush1.bf16.xpose.msra.mxu0 0
    %1002 = vmatprep.subr.bf16.mxu0 0
    %1003 = vmatpush1.bf16.xpose.msra.mxu0 0
    %1004 = vmatprep.subr.bf16.mxu0 0
    %1005 = vmatpush1.bf16.xpose.msra.mxu0 0
    %1006 = vmatprep.subr.bf16.mxu0 0
    %1007 = vmatpush1.bf16.xpose.msra.mxu0 0
    %1008 = vmatprep.subr.bf16.mxu0 0
    %1009 = vmatpush1.bf16.xpose.msra.mxu0 0
    %1010 = vmatprep.subr.bf16.mxu0 0
    %1011 = vmatpush1.bf16.xpose.msra.mxu0 0
    %1012 = vmatprep.subr.bf16.mxu0 0
    %1013 = vmatpush1.bf16.xpose.msra.mxu0 0
    %1014 = vmatprep.subr.bf16.mxu0 0
    %1015 = vmatpush1.bf16.xpose.msra.mxu0 0
    %1016 = vmatprep.subr.bf16.mxu0 0
    %1017 = vmatpush1.bf16.xpose.msra.mxu0 0
    %1018 = vmatprep.mubr.bf16.mxu0 0
    %1019 = vmatmul.mubr.bf16.gmra.mrb[0].mxu0 %v981
    %v1020 = vpop.f32.mrb[0].mxu0
    %v1021 = vadd.f32 0.0, %v1020
    %v1022 = vpop.f32.mrb[0].mxu0
    %v1023 = vpop.f32.mrb[0].mxu0
    %v1024 = vpop.f32.mrb[0].mxu0
    %1025 = vdwg.mxu0
    %v1026 = vsel %vm399, %v1021, -inf
    %1027 = vmax.xlane.f32.xlu0 %v1026
    %v1028 = vpop.xlane.xlu0 %1027
    %v1029 = vsub.f32 %v1021, %v1028
    %v1030 = vmul.f32 %v1029, 1.442695
    %v1031 = vpow.pop %v1030
    %v1032 = vsel %vm399, %v1031, 0.0
    %1033 = vadd.xlane.f32.xlu0 %v1032
    %v1034 = vpop.xlane.xlu0 %1033
    %v1035 = vrcp.pop %v1034
    %v1036 = vmul.f32 %v1031, %v1035
    %s1037 = scalar_lea.vmem [#allocation29], 40
    %1038 = vst.msk [vmem:[%s1037] sm:$0xff] %vm399, %v1036
    %v1039 = vmul.f32 %v1036, %v391
    %v1040 = vpack.c.bf16 %v1039, %v1039
    %1042 = vrot.lane.b32.xlu0 %v865, 120
    %v1043 = vpop.permute.xlu0 %1042
    %v1045 = vsel %vm399, %v1040, 0
    %v1048 = vsel %vm463, %v1043, 0
    %1050 = vmatprep.subr.bf16.mxu0 0
    %1051 = vmatpush1.bf16.msra.mxu0 %v1048
    %1052 = vmatprep.subr.bf16.mxu0 0
    %1053 = vmatpush1.bf16.msra.mxu0 0
    %1054 = vmatprep.subr.bf16.mxu0 0
    %1055 = vmatpush1.bf16.msra.mxu0 0
    %1056 = vmatprep.subr.bf16.mxu0 0
    %1057 = vmatpush1.bf16.msra.mxu0 0
    %1058 = vmatprep.subr.bf16.mxu0 0
    %1059 = vmatpush1.bf16.msra.mxu0 0
    %1060 = vmatprep.subr.bf16.mxu0 0
    %1061 = vmatpush1.bf16.msra.mxu0 0
    %1062 = vmatprep.subr.bf16.mxu0 0
    %1063 = vmatpush1.bf16.msra.mxu0 0
    %1064 = vmatprep.subr.bf16.mxu0 0
    %1065 = vmatpush1.bf16.msra.mxu0 0
    %1066 = vmatprep.subr.bf16.mxu0 0
    %1067 = vmatpush1.bf16.msra.mxu0 0
    %1068 = vmatprep.subr.bf16.mxu0 0
    %1069 = vmatpush1.bf16.msra.mxu0 0
    %1070 = vmatprep.subr.bf16.mxu0 0
    %1071 = vmatpush1.bf16.msra.mxu0 0
    %1072 = vmatprep.subr.bf16.mxu0 0
    %1073 = vmatpush1.bf16.msra.mxu0 0
    %1074 = vmatprep.subr.bf16.mxu0 0
    %1075 = vmatpush1.bf16.msra.mxu0 0
    %1076 = vmatprep.subr.bf16.mxu0 0
    %1077 = vmatpush1.bf16.msra.mxu0 0
    %1078 = vmatprep.subr.bf16.mxu0 0
    %1079 = vmatpush1.bf16.msra.mxu0 0
    %1080 = vmatprep.subr.bf16.mxu0 0
    %1081 = vmatpush1.bf16.msra.mxu0 0
    %1082 = vmatprep.mubr.bf16.mxu0 0
    %1083 = vmatmul.mubr.bf16.gmra.mrb[0].mxu0 %v1045
    %v1084 = vpop.f32.mrb[0].mxu0
    %v1085 = vadd.f32 0.0, %v1084
    %v1086 = vpop.f32.mrb[0].mxu0
    %v1087 = vpop.f32.mrb[0].mxu0
    %v1088 = vpop.f32.mrb[0].mxu0
    %1089 = vdwg.mxu0
    %1090 = vrot.lane.b32.xlu0 %v864, 112
    %v1091 = vpop.permute.xlu0 %1090
    %1092 = vrot.lane.b32.xlu0 %v864, 80
    %v1093 = vpop.permute.xlu0 %1092
    %v1095 = vsel %vm399, %v1091, 0
    %v1098 = vsel %vm399, %v1093, 0
    %1100 = vmatprep.subr.bf16.mxu0 0
    %1101 = vmatpush1.bf16.xpose.msra.mxu0 %v1098
    %1102 = vmatprep.subr.bf16.mxu0 0
    %1103 = vmatpush1.bf16.xpose.msra.mxu0 0
    %1104 = vmatprep.subr.bf16.mxu0 0
    %1105 = vmatpush1.bf16.xpose.msra.mxu0 0
    %1106 = vmatprep.subr.bf16.mxu0 0
    %1107 = vmatpush1.bf16.xpose.msra.mxu0 0
    %1108 = vmatprep.subr.bf16.mxu0 0
    %1109 = vmatpush1.bf16.xpose.msra.mxu0 0
    %1110 = vmatprep.subr.bf16.mxu0 0
    %1111 = vmatpush1.bf16.xpose.msra.mxu0 0
    %1112 = vmatprep.subr.bf16.mxu0 0
    %1113 = vmatpush1.bf16.xpose.msra.mxu0 0
    %1114 = vmatprep.subr.bf16.mxu0 0
    %1115 = vmatpush1.bf16.xpose.msra.mxu0 0
    %1116 = vmatprep.subr.bf16.mxu0 0
    %1117 = vmatpush1.bf16.xpose.msra.mxu0 0
    %1118 = vmatprep.subr.bf16.mxu0 0
    %1119 = vmatpush1.bf16.xpose.msra.mxu0 0
    %1120 = vmatprep.subr.bf16.mxu0 0
    %1121 = vmatpush1.bf16.xpose.msra.mxu0 0
    %1122 = vmatprep.subr.bf16.mxu0 0
    %1123 = vmatpush1.bf16.xpose.msra.mxu0 0
    %1124 = vmatprep.subr.bf16.mxu0 0
    %1125 = vmatpush1.bf16.xpose.msra.mxu0 0
    %1126 = vmatprep.subr.bf16.mxu0 0
    %1127 = vmatpush1.bf16.xpose.msra.mxu0 0
    %1128 = vmatprep.subr.bf16.mxu0 0
    %1129 = vmatpush1.bf16.xpose.msra.mxu0 0
    %1130 = vmatprep.subr.bf16.mxu0 0
    %1131 = vmatpush1.bf16.xpose.msra.mxu0 0
    %1132 = vmatprep.mubr.bf16.mxu0 0
    %1133 = vmatmul.mubr.bf16.gmra.mrb[0].mxu0 %v1095
    %v1134 = vpop.f32.mrb[0].mxu0
    %v1135 = vadd.f32 0.0, %v1134
    %v1136 = vpop.f32.mrb[0].mxu0
    %v1137 = vpop.f32.mrb[0].mxu0
    %v1138 = vpop.f32.mrb[0].mxu0
    %1139 = vdwg.mxu0
    %v1140 = vsel %vm399, %v1135, -inf
    %1141 = vmax.xlane.f32.xlu0 %v1140
    %v1142 = vpop.xlane.xlu0 %1141
    %v1143 = vsub.f32 %v1135, %v1142
    %v1144 = vmul.f32 %v1143, 1.442695
    %v1145 = vpow.pop %v1144
    %v1146 = vsel %vm399, %v1145, 0.0
    %1147 = vadd.xlane.f32.xlu0 %v1146
    %v1148 = vpop.xlane.xlu0 %1147
    %v1149 = vrcp.pop %v1148
    %v1150 = vmul.f32 %v1145, %v1149
    %s1151 = scalar_lea.vmem [#allocation29], 48
    %1152 = vst.msk [vmem:[%s1151] sm:$0xff] %vm399, %v1150
    %v1153 = vmul.f32 %v1150, %v392
    %v1154 = vpack.c.bf16 %v1153, %v1153
    %1155 = vrot.lane.b32.xlu0 %v865, 112
    %v1156 = vpop.permute.xlu0 %1155
    %v1158 = vsel %vm399, %v1154, 0
    %v1161 = vsel %vm463, %v1156, 0
    %1163 = vmatprep.subr.bf16.mxu0 0
    %1164 = vmatpush1.bf16.msra.mxu0 %v1161
    %1165 = vmatprep.subr.bf16.mxu0 0
    %1166 = vmatpush1.bf16.msra.mxu0 0
    %1167 = vmatprep.subr.bf16.mxu0 0
    %1168 = vmatpush1.bf16.msra.mxu0 0
    %1169 = vmatprep.subr.bf16.mxu0 0
    %1170 = vmatpush1.bf16.msra.mxu0 0
    %1171 = vmatprep.subr.bf16.mxu0 0
    %1172 = vmatpush1.bf16.msra.mxu0 0
    %1173 = vmatprep.subr.bf16.mxu0 0
    %1174 = vmatpush1.bf16.msra.mxu0 0
    %1175 = vmatprep.subr.bf16.mxu0 0
    %1176 = vmatpush1.bf16.msra.mxu0 0
    %1177 = vmatprep.subr.bf16.mxu0 0
    %1178 = vmatpush1.bf16.msra.mxu0 0
    %1179 = vmatprep.subr.bf16.mxu0 0
    %1180 = vmatpush1.bf16.msra.mxu0 0
    %1181 = vmatprep.subr.bf16.mxu0 0
    %1182 = vmatpush1.bf16.msra.mxu0 0
    %1183 = vmatprep.subr.bf16.mxu0 0
    %1184 = vmatpush1.bf16.msra.mxu0 0
    %1185 = vmatprep.subr.bf16.mxu0 0
    %1186 = vmatpush1.bf16.msra.mxu0 0
    %1187 = vmatprep.subr.bf16.mxu0 0
    %1188 = vmatpush1.bf16.msra.mxu0 0
    %1189 = vmatprep.subr.bf16.mxu0 0
    %1190 = vmatpush1.bf16.msra.mxu0 0
    %1191 = vmatprep.subr.bf16.mxu0 0
    %1192 = vmatpush1.bf16.msra.mxu0 0
    %1193 = vmatprep.subr.bf16.mxu0 0
    %1194 = vmatpush1.bf16.msra.mxu0 0
    %1195 = vmatprep.mubr.bf16.mxu0 0
    %1196 = vmatmul.mubr.bf16.gmra.mrb[0].mxu0 %v1158
    %v1197 = vpop.f32.mrb[0].mxu0
    %v1198 = vadd.f32 0.0, %v1197
    %v1199 = vpop.f32.mrb[0].mxu0
    %v1200 = vpop.f32.mrb[0].mxu0
    %v1201 = vpop.f32.mrb[0].mxu0
    %1202 = vdwg.mxu0
    %1203 = vrot.lane.b32.xlu0 %v864, 104
    %v1204 = vpop.permute.xlu0 %1203
    %1205 = vrot.lane.b32.xlu0 %v864, 72
    %v1206 = vpop.permute.xlu0 %1205
    %v1208 = vsel %vm399, %v1204, 0
    %v1211 = vsel %vm399, %v1206, 0
    %1213 = vmatprep.subr.bf16.mxu0 0
    %1214 = vmatpush1.bf16.xpose.msra.mxu0 %v1211
    %1215 = vmatprep.subr.bf16.mxu0 0
    %1216 = vmatpush1.bf16.xpose.msra.mxu0 0
    %1217 = vmatprep.subr.bf16.mxu0 0
    %1218 = vmatpush1.bf16.xpose.msra.mxu0 0
    %1219 = vmatprep.subr.bf16.mxu0 0
    %1220 = vmatpush1.bf16.xpose.msra.mxu0 0
    %1221 = vmatprep.subr.bf16.mxu0 0
    %1222 = vmatpush1.bf16.xpose.msra.mxu0 0
    %1223 = vmatprep.subr.bf16.mxu0 0
    %1224 = vmatpush1.bf16.xpose.msra.mxu0 0
    %1225 = vmatprep.subr.bf16.mxu0 0
    %1226 = vmatpush1.bf16.xpose.msra.mxu0 0
    %1227 = vmatprep.subr.bf16.mxu0 0
    %1228 = vmatpush1.bf16.xpose.msra.mxu0 0
    %1229 = vmatprep.subr.bf16.mxu0 0
    %1230 = vmatpush1.bf16.xpose.msra.mxu0 0
    %1231 = vmatprep.subr.bf16.mxu0 0
    %1232 = vmatpush1.bf16.xpose.msra.mxu0 0
    %1233 = vmatprep.subr.bf16.mxu0 0
    %1234 = vmatpush1.bf16.xpose.msra.mxu0 0
    %1235 = vmatprep.subr.bf16.mxu0 0
    %1236 = vmatpush1.bf16.xpose.msra.mxu0 0
    %1237 = vmatprep.subr.bf16.mxu0 0
    %1238 = vmatpush1.bf16.xpose.msra.mxu0 0
    %1239 = vmatprep.subr.bf16.mxu0 0
    %1240 = vmatpush1.bf16.xpose.msra.mxu0 0
    %1241 = vmatprep.subr.bf16.mxu0 0
    %1242 = vmatpush1.bf16.xpose.msra.mxu0 0
    %1243 = vmatprep.subr.bf16.mxu0 0
    %1244 = vmatpush1.bf16.xpose.msra.mxu0 0
    %1245 = vmatprep.mubr.bf16.mxu0 0
    %1246 = vmatmul.mubr.bf16.gmra.mrb[0].mxu0 %v1208
    %v1247 = vpop.f32.mrb[0].mxu0
    %v1248 = vadd.f32 0.0, %v1247
    %v1249 = vpop.f32.mrb[0].mxu0
    %v1250 = vpop.f32.mrb[0].mxu0
    %v1251 = vpop.f32.mrb[0].mxu0
    %1252 = vdwg.mxu0
    %v1253 = vsel %vm399, %v1248, -inf
    %1254 = vmax.xlane.f32.xlu0 %v1253
    %v1255 = vpop.xlane.xlu0 %1254
    %v1256 = vsub.f32 %v1248, %v1255
    %v1257 = vmul.f32 %v1256, 1.442695
    %v1258 = vpow.pop %v1257
    %v1259 = vsel %vm399, %v1258, 0.0
    %1260 = vadd.xlane.f32.xlu0 %v1259
    %v1261 = vpop.xlane.xlu0 %1260
    %v1262 = vrcp.pop %v1261
    %v1263 = vmul.f32 %v1258, %v1262
    %s1264 = scalar_lea.vmem [#allocation29], 56
    %1265 = vst.msk [vmem:[%s1264] sm:$0xff] %vm399, %v1263
    %v1266 = vmul.f32 %v1263, %v393
    %v1267 = vpack.c.bf16 %v1266, %v1266
    %1268 = vrot.lane.b32.xlu0 %v865, 104
    %v1269 = vpop.permute.xlu0 %1268
    %v1271 = vsel %vm399, %v1267, 0
    %v1274 = vsel %vm463, %v1269, 0
    %1276 = vmatprep.subr.bf16.mxu0 0
    %1277 = vmatpush1.bf16.msra.mxu0 %v1274
    %1278 = vmatprep.subr.bf16.mxu0 0
    %1279 = vmatpush1.bf16.msra.mxu0 0
    %1280 = vmatprep.subr.bf16.mxu0 0
    %1281 = vmatpush1.bf16.msra.mxu0 0
    %1282 = vmatprep.subr.bf16.mxu0 0
    %1283 = vmatpush1.bf16.msra.mxu0 0
    %1284 = vmatprep.subr.bf16.mxu0 0
    %1285 = vmatpush1.bf16.msra.mxu0 0
    %1286 = vmatprep.subr.bf16.mxu0 0
    %1287 = vmatpush1.bf16.msra.mxu0 0
    %1288 = vmatprep.subr.bf16.mxu0 0
    %1289 = vmatpush1.bf16.msra.mxu0 0
    %1290 = vmatprep.subr.bf16.mxu0 0
    %1291 = vmatpush1.bf16.msra.mxu0 0
    %1292 = vmatprep.subr.bf16.mxu0 0
    %1293 = vmatpush1.bf16.msra.mxu0 0
    %1294 = vmatprep.subr.bf16.mxu0 0
    %1295 = vmatpush1.bf16.msra.mxu0 0
    %1296 = vmatprep.subr.bf16.mxu0 0
    %1297 = vmatpush1.bf16.msra.mxu0 0
    %1298 = vmatprep.subr.bf16.mxu0 0
    %1299 = vmatpush1.bf16.msra.mxu0 0
    %1300 = vmatprep.subr.bf16.mxu0 0
    %1301 = vmatpush1.bf16.msra.mxu0 0
    %1302 = vmatprep.subr.bf16.mxu0 0
    %1303 = vmatpush1.bf16.msra.mxu0 0
    %1304 = vmatprep.subr.bf16.mxu0 0
    %1305 = vmatpush1.bf16.msra.mxu0 0
    %1306 = vmatprep.subr.bf16.mxu0 0
    %1307 = vmatpush1.bf16.msra.mxu0 0
    %1308 = vmatprep.mubr.bf16.mxu0 0
    %1309 = vmatmul.mubr.bf16.gmra.mrb[0].mxu0 %v1271
    %v1310 = vpop.f32.mrb[0].mxu0
    %v1311 = vadd.f32 0.0, %v1310
    %v1312 = vpop.f32.mrb[0].mxu0
    %v1313 = vpop.f32.mrb[0].mxu0
    %v1314 = vpop.f32.mrb[0].mxu0
    %1315 = vdwg.mxu0
    %1317 = vrot.lane.b32.xlu0 %v1085, 8
    %v1318 = vpop.permute.xlu0 %1317
    %1321 = vrot.lane.b32.xlu0 %v1198, 16
    %v1322 = vpop.permute.xlu0 %1321
    %1325 = vrot.lane.b32.xlu0 %v1311, 24
    %v1326 = vpop.permute.xlu0 %1325
    %v1328 = vsel %vm399, %v971, %v1318
    %v1329 = vsel %vm860, %v1328, %v1322
    %v1330 = vsel %vm862, %v1329, %v1326
    %v1331 = vpack.c.bf16 %v1330, %v863
    %v1332 = vld [vmem:[#allocation11] sm:$0xf]
    %v1333 = vld [vmem:[#allocation11 + $0x4] sm:$0xf]
    %v1334 = vld [vmem:[#allocation11 + $0x8] sm:$0xf]
    %v1335 = vld [vmem:[#allocation11 + $0xc] sm:$0xf]
    %v1340 = vunpack.c.l.b16 %v1332
    %v1341 = vunpack.c.l.b16 %v1333
    %v1342 = vunpack.c.l.b16 %v1334
    %v1343 = vunpack.c.l.b16 %v1335
    %v1344 = vpack.c.b16 %v1341, %v1340
    %v1345 = vpack.c.b16 %v1343, %v1342
    %v1349 = vsel %vm281, %v1331, 0
    %1351 = vmatprep.subr.bf16.mxu0 0
    %1352 = vmatpush1.bf16.msra.mxu0 %v1344
    %1353 = vmatprep.subr.bf16.mxu0 0
    %1354 = vmatpush1.bf16.msra.mxu0 %v1345
    %1355 = vmatprep.subr.bf16.mxu0 0
    %1356 = vmatpush1.bf16.msra.mxu0 0
    %1357 = vmatprep.subr.bf16.mxu0 0
    %1358 = vmatpush1.bf16.msra.mxu0 0
    %1359 = vmatprep.subr.bf16.mxu0 0
    %1360 = vmatpush1.bf16.msra.mxu0 0
    %1361 = vmatprep.subr.bf16.mxu0 0
    %1362 = vmatpush1.bf16.msra.mxu0 0
    %1363 = vmatprep.subr.bf16.mxu0 0
    %1364 = vmatpush1.bf16.msra.mxu0 0
    %1365 = vmatprep.subr.bf16.mxu0 0
    %1366 = vmatpush1.bf16.msra.mxu0 0
    %1367 = vmatprep.subr.bf16.mxu0 0
    %1368 = vmatpush1.bf16.msra.mxu0 0
    %1369 = vmatprep.subr.bf16.mxu0 0
    %1370 = vmatpush1.bf16.msra.mxu0 0
    %1371 = vmatprep.subr.bf16.mxu0 0
    %1372 = vmatpush1.bf16.msra.mxu0 0
    %1373 = vmatprep.subr.bf16.mxu0 0
    %1374 = vmatpush1.bf16.msra.mxu0 0
    %1375 = vmatprep.subr.bf16.mxu0 0
    %1376 = vmatpush1.bf16.msra.mxu0 0
    %1377 = vmatprep.subr.bf16.mxu0 0
    %1378 = vmatpush1.bf16.msra.mxu0 0
    %1379 = vmatprep.subr.bf16.mxu0 0
    %1380 = vmatpush1.bf16.msra.mxu0 0
    %1381 = vmatprep.subr.bf16.mxu0 0
    %1382 = vmatpush1.bf16.msra.mxu0 0
    %1383 = vmatprep.mubr.bf16.mxu0 0
    %1384 = vmatmul.mubr.bf16.gmra.mrb[0].mxu0 %v1349
    %v1385 = vpop.f32.mrb[0].mxu0
    %v1386 = vadd.f32 %v261, %v1385
    %v1387 = vpop.f32.mrb[0].mxu0
    %v1388 = vpop.f32.mrb[0].mxu0
    %v1389 = vadd.f32 %v262, %v1388
    %v1390 = vpop.f32.mrb[0].mxu0
    %1391 = vdwg.mxu0
    %v1392 = vld [vmem:[#allocation13] sm:$0x1]
    %v1393 = vld [vmem:[#allocation14] sm:$0x1]
    %v1394 = vsel %vm281, %v1386, 0.0
    %1395 = vadd.xlane.f32.xlu0 %v1394
    %v1396 = vpop.xlane.xlu0 %1395
    %v1397 = vsel %vm281, %v1389, 0.0
    %1398 = vadd.xlane.f32.xlu0 %v1397
    %v1399 = vpop.xlane.xlu0 %1398
    %v1400 = vrcp.pop 32.0
    %v1401 = vmul.f32 %v1396, %v1400
    %v1402 = vmul.f32 %v1399, %v1400
    %v1403 = vsub.f32 %v1386, %v1401
    %v1404 = vsub.f32 %v1389, %v1402
    %v1405 = vmul.f32 %v1403, %v1403
    %v1406 = vmul.f32 %v1404, %v1404
    %v1407 = vsel %vm281, %v1405, 0.0
    %1408 = vadd.xlane.f32.xlu0 %v1407
    %v1409 = vpop.xlane.xlu0 %1408
    %v1410 = vsel %vm281, %v1406, 0.0
    %1411 = vadd.xlane.f32.xlu0 %v1410
    %v1412 = vpop.xlane.xlu0 %1411
    %v1413 = vmul.f32 %v1409, %v1400
    %v1414 = vmul.f32 %v1412, %v1400
    %v1415 = vadd.f32 %v1413, 1e-06
    %v1416 = vadd.f32 %v1414, 1e-06
    %v1417 = vrsqrt.pop %v1415
    %v1418 = vrsqrt.pop %v1416
    %v1419 = vmul.f32 %v1403, %v1417
    %v1420 = vmul.f32 %v1404, %v1418
    %v1422 = vlaneseq
    %v1423 = vshrl.u32 %v1422, 7
    %v1424 = vsub.s32 0, %v1423
    %v1425 = vrot.slane %v1392, %v1424
    %v1427 = vmul.f32 %v1419, %v1425
    %v1428 = vmul.f32 %v1420, %v1425
    %v1430 = vlaneseq
    %v1431 = vshrl.u32 %v1430, 7
    %v1432 = vsub.s32 0, %v1431
    %v1433 = vrot.slane %v1393, %v1432
    %v1435 = vadd.f32 %v1427, %v1433
    %v1436 = vadd.f32 %v1428, %v1433
    %v1437 = vadd.f32 %v259, %v1435
    %v1438 = vadd.f32 %v260, %v1436
    %v1439 = vld [vmem:[#allocation16] sm:$0x1]
    %v1440 = vld [vmem:[#allocation17] sm:$0x1]
    %v1441 = vsel %vm281, %v1437, 0.0
    %1442 = vadd.xlane.f32.xlu0 %v1441
    %v1443 = vpop.xlane.xlu0 %1442
    %v1444 = vsel %vm281, %v1438, 0.0
    %1445 = vadd.xlane.f32.xlu0 %v1444
    %v1446 = vpop.xlane.xlu0 %1445
    %v1447 = vmul.f32 %v1443, %v1400
    %v1448 = vmul.f32 %v1446, %v1400
    %v1449 = vsub.f32 %v1437, %v1447
    %v1450 = vsub.f32 %v1438, %v1448
    %v1451 = vmul.f32 %v1449, %v1449
    %v1452 = vmul.f32 %v1450, %v1450
    %v1453 = vsel %vm281, %v1451, 0.0
    %1454 = vadd.xlane.f32.xlu0 %v1453
    %v1455 = vpop.xlane.xlu0 %1454
    %v1456 = vsel %vm281, %v1452, 0.0
    %1457 = vadd.xlane.f32.xlu0 %v1456
    %v1458 = vpop.xlane.xlu0 %1457
    %v1459 = vmul.f32 %v1455, %v1400
    %v1460 = vmul.f32 %v1458, %v1400
    %v1461 = vadd.f32 %v1459, 1e-05
    %v1462 = vadd.f32 %v1460, 1e-05
    %v1463 = vrsqrt.pop %v1461
    %v1464 = vrsqrt.pop %v1462
    %v1465 = vmul.f32 %v1449, %v1463
    %v1466 = vmul.f32 %v1450, %v1464
    %v1468 = vlaneseq
    %v1469 = vshrl.u32 %v1468, 7
    %v1470 = vsub.s32 0, %v1469
    %v1471 = vrot.slane %v1439, %v1470
    %v1473 = vmul.f32 %v1465, %v1471
    %v1474 = vmul.f32 %v1466, %v1471
    %v1476 = vlaneseq
    %v1477 = vshrl.u32 %v1476, 7
    %v1478 = vsub.s32 0, %v1477
    %v1479 = vrot.slane %v1440, %v1478
    %v1481 = vadd.f32 %v1473, %v1479
    %v1482 = vadd.f32 %v1474, %v1479
    %v1483 = vpack.c.bf16 %v1482, %v1481
    %v1484 = vld [vmem:[#allocation22] sm:$0xf]
    %v1485 = vld [vmem:[#allocation22 + $0x4] sm:$0xf]
    %v1486 = vld [vmem:[#allocation22 + $0x8] sm:$0xf]
    %v1487 = vld [vmem:[#allocation22 + $0xc] sm:$0xf]
    %v1488 = vld [vmem:[#allocation23] sm:$0x1]
    %v1490 = vlaneseq
    %v1491 = vshrl.u32 %v1490, 7
    %v1492 = vsub.s32 0, %v1491
    %v1493 = vrot.slane %v1488, %v1492
    %v1499 = vunpack.c.l.b16 %v1484
    %v1500 = vunpack.c.l.b16 %v1485
    %v1501 = vunpack.c.l.b16 %v1486
    %v1502 = vunpack.c.l.b16 %v1487
    %v1503 = vpack.c.b16 %v1500, %v1499
    %v1504 = vpack.c.b16 %v1502, %v1501
    %v1508 = vsel %vm281, %v1483, 0
    %1510 = vmatprep.subr.bf16.mxu0 0
    %1511 = vmatpush1.bf16.msra.mxu0 %v1503
    %1512 = vmatprep.subr.bf16.mxu0 0
    %1513 = vmatpush1.bf16.msra.mxu0 %v1504
    %1514 = vmatprep.subr.bf16.mxu0 0
    %1515 = vmatpush1.bf16.msra.mxu0 0
    %1516 = vmatprep.subr.bf16.mxu0 0
    %1517 = vmatpush1.bf16.msra.mxu0 0
    %1518 = vmatprep.subr.bf16.mxu0 0
    %1519 = vmatpush1.bf16.msra.mxu0 0
    %1520 = vmatprep.subr.bf16.mxu0 0
    %1521 = vmatpush1.bf16.msra.mxu0 0
    %1522 = vmatprep.subr.bf16.mxu0 0
    %1523 = vmatpush1.bf16.msra.mxu0 0
    %1524 = vmatprep.subr.bf16.mxu0 0
    %1525 = vmatpush1.bf16.msra.mxu0 0
    %1526 = vmatprep.subr.bf16.mxu0 0
    %1527 = vmatpush1.bf16.msra.mxu0 0
    %1528 = vmatprep.subr.bf16.mxu0 0
    %1529 = vmatpush1.bf16.msra.mxu0 0
    %1530 = vmatprep.subr.bf16.mxu0 0
    %1531 = vmatpush1.bf16.msra.mxu0 0
    %1532 = vmatprep.subr.bf16.mxu0 0
    %1533 = vmatpush1.bf16.msra.mxu0 0
    %1534 = vmatprep.subr.bf16.mxu0 0
    %1535 = vmatpush1.bf16.msra.mxu0 0
    %1536 = vmatprep.subr.bf16.mxu0 0
    %1537 = vmatpush1.bf16.msra.mxu0 0
    %1538 = vmatprep.subr.bf16.mxu0 0
    %1539 = vmatpush1.bf16.msra.mxu0 0
    %1540 = vmatprep.subr.bf16.mxu0 0
    %1541 = vmatpush1.bf16.msra.mxu0 0
    %1542 = vmatprep.mubr.bf16.mxu0 0
    %1543 = vmatmul.mubr.bf16.gmra.mrb[0].mxu0 %v1508
    %v1544 = vpop.f32.mrb[0].mxu0
    %v1545 = vadd.f32 %v1493, %v1544
    %v1546 = vpop.f32.mrb[0].mxu0
    %v1547 = vpop.f32.mrb[0].mxu0
    %v1548 = vadd.f32 %v1493, %v1547
    %v1549 = vpop.f32.mrb[0].mxu0
    %1550 = vdwg.mxu0
    %v1551 = vmax.f32 %v1545, 0.0
    %v1552 = vmax.f32 %v1548, 0.0
    %v1553 = vpack.c.bf16 %v1552, %v1551
    %v1554 = vld [vmem:[#allocation25] sm:$0xf]
    %v1555 = vld [vmem:[#allocation25 + $0x4] sm:$0xf]
    %v1556 = vld [vmem:[#allocation25 + $0x8] sm:$0xf]
    %v1557 = vld [vmem:[#allocation25 + $0xc] sm:$0xf]
    %v1558 = vld [vmem:[#allocation25 + $0x10] sm:$0xf]
    %v1559 = vld [vmem:[#allocation25 + $0x14] sm:$0xf]
    %v1560 = vld [vmem:[#allocation25 + $0x18] sm:$0xf]
    %v1561 = vld [vmem:[#allocation25 + $0x1c] sm:$0xf]
    %v1562 = vld [vmem:[#allocation26] sm:$0x1]
    %v1564 = vlaneseq
    %v1565 = vshrl.u32 %v1564, 7
    %v1566 = vsub.s32 0, %v1565
    %v1567 = vrot.slane %v1562, %v1566
    %v1577 = vunpack.c.l.b16 %v1554
    %v1578 = vunpack.c.l.b16 %v1555
    %v1579 = vunpack.c.l.b16 %v1556
    %v1580 = vunpack.c.l.b16 %v1557
    %v1581 = vunpack.c.l.b16 %v1558
    %v1582 = vunpack.c.l.b16 %v1559
    %v1583 = vunpack.c.l.b16 %v1560
    %v1584 = vunpack.c.l.b16 %v1561
    %v1585 = vpack.c.b16 %v1578, %v1577
    %v1586 = vpack.c.b16 %v1580, %v1579
    %v1587 = vpack.c.b16 %v1582, %v1581
    %v1588 = vpack.c.b16 %v1584, %v1583
    %vm1593 = vcmask 523264
    %v1595 = vsel %vm1593, %v1553, 0
    %1597 = vmatprep.subr.bf16.mxu0 0
    %1598 = vmatpush1.bf16.msra.mxu0 %v1585
    %1599 = vmatprep.subr.bf16.mxu0 0
    %1600 = vmatpush1.bf16.msra.mxu0 %v1586
    %1601 = vmatprep.subr.bf16.mxu0 0
    %1602 = vmatpush1.bf16.msra.mxu0 %v1587
    %1603 = vmatprep.subr.bf16.mxu0 0
    %1604 = vmatpush1.bf16.msra.mxu0 %v1588
    %1605 = vmatprep.subr.bf16.mxu0 0
    %1606 = vmatpush1.bf16.msra.mxu0 0
    %1607 = vmatprep.subr.bf16.mxu0 0
    %1608 = vmatpush1.bf16.msra.mxu0 0
    %1609 = vmatprep.subr.bf16.mxu0 0
    %1610 = vmatpush1.bf16.msra.mxu0 0
    %1611 = vmatprep.subr.bf16.mxu0 0
    %1612 = vmatpush1.bf16.msra.mxu0 0
    %1613 = vmatprep.subr.bf16.mxu0 0
    %1614 = vmatpush1.bf16.msra.mxu0 0
    %1615 = vmatprep.subr.bf16.mxu0 0
    %1616 = vmatpush1.bf16.msra.mxu0 0
    %1617 = vmatprep.subr.bf16.mxu0 0
    %1618 = vmatpush1.bf16.msra.mxu0 0
    %1619 = vmatprep.subr.bf16.mxu0 0
    %1620 = vmatpush1.bf16.msra.mxu0 0
    %1621 = vmatprep.subr.bf16.mxu0 0
    %1622 = vmatpush1.bf16.msra.mxu0 0
    %1623 = vmatprep.subr.bf16.mxu0 0
    %1624 = vmatpush1.bf16.msra.mxu0 0
    %1625 = vmatprep.subr.bf16.mxu0 0
    %1626 = vmatpush1.bf16.msra.mxu0 0
    %1627 = vmatprep.subr.bf16.mxu0 0
    %1628 = vmatpush1.bf16.msra.mxu0 0
    %1629 = vmatprep.mubr.bf16.mxu0 0
    %1630 = vmatmul.mubr.bf16.gmra.mrb[0].mxu0 %v1595
    %v1631 = vpop.f32.mrb[0].mxu0
    %v1632 = vadd.f32 %v1567, %v1631
    %v1633 = vpop.f32.mrb[0].mxu0
    %v1634 = vpop.f32.mrb[0].mxu0
    %v1635 = vadd.f32 %v1567, %v1634
    %v1636 = vpop.f32.mrb[0].mxu0
    %1637 = vdwg.mxu0
    %v1638 = vadd.f32 %v1481, %v1632
    %v1639 = vadd.f32 %v1482, %v1635
    %v1640 = vld [vmem:[#allocation19] sm:$0x1]
    %v1641 = vld [vmem:[#allocation20] sm:$0x1]
    %v1642 = vsel %vm281, %v1638, 0.0
    %1643 = vadd.xlane.f32.xlu0 %v1642
    %v1644 = vpop.xlane.xlu0 %1643
    %v1645 = vsel %vm281, %v1639, 0.0
    %1646 = vadd.xlane.f32.xlu0 %v1645
    %v1647 = vpop.xlane.xlu0 %1646
    %v1648 = vmul.f32 %v1644, %v1400
    %v1649 = vmul.f32 %v1647, %v1400
    %v1650 = vsub.f32 %v1638, %v1648
    %v1651 = vsub.f32 %v1639, %v1649
    %v1652 = vmul.f32 %v1650, %v1650
    %v1653 = vmul.f32 %v1651, %v1651
    %v1654 = vsel %vm281, %v1652, 0.0
    %1655 = vadd.xlane.f32.xlu0 %v1654
    %v1656 = vpop.xlane.xlu0 %1655
    %v1657 = vsel %vm281, %v1653, 0.0
    %1658 = vadd.xlane.f32.xlu0 %v1657
    %v1659 = vpop.xlane.xlu0 %1658
    %v1660 = vmul.f32 %v1656, %v1400
    %v1661 = vmul.f32 %v1659, %v1400
    %v1662 = vadd.f32 %v1660, 1e-05
    %v1663 = vadd.f32 %v1661, 1e-05
    %v1664 = vrsqrt.pop %v1662
    %v1665 = vrsqrt.pop %v1663
    %v1666 = vmul.f32 %v1650, %v1664
    %v1667 = vmul.f32 %v1651, %v1665
    %v1669 = vlaneseq
    %v1670 = vshrl.u32 %v1669, 7
    %v1671 = vsub.s32 0, %v1670
    %v1672 = vrot.slane %v1640, %v1671
    %v1674 = vmul.f32 %v1666, %v1672
    %v1675 = vmul.f32 %v1667, %v1672
    %v1677 = vlaneseq
    %v1678 = vshrl.u32 %v1677, 7
    %v1679 = vsub.s32 0, %v1678
    %v1680 = vrot.slane %v1641, %v1679
    %v1682 = vadd.f32 %v1674, %v1680
    %v1683 = vadd.f32 %v1675, %v1680
    %1684 = vst.msk [vmem:[#allocation28] sm:$0xff] %vm281, %v1682
    %1685 = vst.msk [vmem:[#allocation28 + $0x8] sm:$0xff] %vm281, %v1683
    // Predicated region
    $region130: #{tpu_custom_call.1} parent=1 // pred_check
      _
    $region131: #{tpu_custom_call.1} parent=1 // pred_check_branch
      %1687 = sbr.rel (0) target = $region133
    $region132: #{tpu_custom_call.1} parent=1 // pred_region
      %s1689 = ssub.s32 256, 256
      %1690 = vsyncadd [#allocation4], %s1689
      %s1691 = sshll.u32 [#allocation28], 4
      %s1692 = int_to_ptr.vmem [resolvable:$true] %s1691
      %1697 = dma.vmem_to_hbm [thread:$0]  %s1692, 256, %s16, [#allocation4], 128, 128, 8
    $region133: #{tpu_custom_call.1} parent=1 // pred_fallthru
      _
    // Predicated region
    $region134: #{tpu_custom_call.1} parent=1 // pred_check
      _
    $region135: #{tpu_custom_call.1} parent=1 // pred_check_branch
      %1699 = sbr.rel (0) target = $region137
    $region136: #{tpu_custom_call.1} parent=1 // pred_region
      %s1701 = ssub.s32 1024, 1024
      %1702 = vsyncadd [#allocation30], %s1701
      %s1703 = sshll.u32 [#allocation29], 4
      %s1704 = int_to_ptr.vmem [resolvable:$true] %s1703
      %1709 = dma.vmem_to_hbm [thread:$0]  %s1704, 1024, %s17, [#allocation30], 128, 128, 8
    $region137: #{tpu_custom_call.1} parent=1 // pred_fallthru
      _
    // Predicated region
    $region138: #{tpu_custom_call.1} parent=1 // pred_check
      _
    $region139: #{tpu_custom_call.1} parent=1 // pred_check_branch
      %1711 = sbr.rel (0) target = $region141
    $region140: #{tpu_custom_call.1} parent=1 // pred_region
      %1712 = dma.done [#allocation4], 256
    $region141: #{tpu_custom_call.1} parent=1 // pred_fallthru
      _
    // Predicated region
    $region142: #{tpu_custom_call.1} parent=1 // pred_check
      _
    $region143: #{tpu_custom_call.1} parent=1 // pred_check_branch
      %1714 = sbr.rel (0) target = $region145
    $region144: #{tpu_custom_call.1} parent=1 // pred_region
      %1715 = dma.done [#allocation30], 1024
    $region145: #{tpu_custom_call.1} parent=1 // pred_fallthru
      _
    %1716 = vsyncpa [#allocation3], 1
    %1717 = vsyncpa [#allocation6], 1
    %1718 = vsyncpa [#allocation9], 1
    %1719 = vsyncpa [#allocation12], 1
    %1720 = vsyncpa [#allocation15], 1
    %1721 = vsyncpa [#allocation18], 1
    %1722 = vsyncpa [#allocation21], 1
    %1723 = vsyncpa [#allocation24], 1
    %1724 = vsyncpa [#allocation27], 1
    %1725 = vsyncpa [#allocation4], 1
    %1726 = vsyncpa [#allocation30], 1

</llo_original>
